<compile_context>
chip_gen: v5e
topology: v5e:2x2
jax: 0.10.0
libtpu: 0.0.40
codegen_flags: <defaults>
</compile_context>

<pallas_src>
import functools

import jax
import jax.numpy as jnp
from jax.experimental import pallas as pl
from jax.experimental.pallas import tpu as pltpu

STATE_DIM = 7
ACTION_DIM = 1
TILE_B = 256          # preferred batch tile (multiple of 128)


def critic_kernel(s_ref, a_ref,
                  w1s_ref, w1a_ref, b1_ref,
                  w2_ref, b2_ref,
                  w3_ref, b3_ref,
                  w4t_ref, b4_ref,
                  out_ref):
    s = s_ref[...]                                   # [TB, S]  f32
    a = a_ref[...]                                   # [TB, A]  f32

    # ---- layer 1: relu(cat([s, a]) @ W1 + b1) == relu(s @ W1[:S] + a @ W1[S:] + b1)
    h = jnp.dot(s.astype(jnp.bfloat16), w1s_ref[...],
                preferred_element_type=jnp.float32)  # [TB, 300] f32 accumulation
    if a.shape[1] == 1:
        # action part is a rank-1 update -> cheap f32 VPU broadcast multiply
        h = h + a * w1a_ref[...]
    else:
        h = h + jnp.dot(a.astype(jnp.bfloat16),
                        w1a_ref[...].astype(jnp.bfloat16),
                        preferred_element_type=jnp.float32)
    h = jnp.maximum(h + b1_ref[...], 0.0)

    # ---- layer 2 ------------------------------------------------------------
    h = jnp.dot(h.astype(jnp.bfloat16), w2_ref[...],
                preferred_element_type=jnp.float32) + b2_ref[...]
    h = jnp.maximum(h, 0.0)                          # [TB, 200]

    # ---- layer 3 ------------------------------------------------------------
    h = jnp.dot(h.astype(jnp.bfloat16), w3_ref[...],
                preferred_element_type=jnp.float32) + b3_ref[...]
    h = jnp.maximum(h, 0.0)                          # [TB, 200]

    # ---- layer 4 (N == 1): VPU multiply + lane reduction, full f32 -----------
    q = jnp.sum(h * w4t_ref[...], axis=-1, keepdims=True) + b4_ref[...]
    out_ref[...] = q                                 # [TB, 1]


def _resident_spec(shape):
    """Whole-array block with a constant index map: DMA'd once, VMEM-resident."""
    ndim = len(shape)
    return pl.BlockSpec(shape, lambda i, _n=ndim: (0,) * _n)


def _round_up(x, m):
    return ((x + m - 1) // m) * m


@functools.partial(jax.jit, static_argnames=("tile_b",))
def critic_forward(s, a, params, tile_b=TILE_B):
    """s: [B, STATE_DIM] f32, a: [B, ACTION_DIM] f32 -> Q: [B, 1] f32."""
    B, state_dim = s.shape
    action_dim = a.shape[1]
    assert params["w1"].shape[0] == state_dim + action_dim

    # Effective tile: multiple of 128, no bigger than needed for small batches.
    tb = min(tile_b, _round_up(B, 128))
    tb = max(tb, 128)

    # One-time parameter prep (plain JAX, negligible): split W1, cast wide
    # matmul weights to bf16 for the MXU, keep biases / rank-1 parts in f32.
    w1 = params["w1"]
    w1s = w1[:state_dim].astype(jnp.bfloat16)        # [S, 300] bf16
    w1a = w1[state_dim:]                             # [A, 300] f32
    w2 = params["w2"].astype(jnp.bfloat16)           # [300, 200] bf16
    w3 = params["w3"].astype(jnp.bfloat16)           # [200, 200] bf16
    w4t = params["w4"].T                             # [1, 200]  f32
    b1, b2, b3, b4 = params["b1"], params["b2"], params["b3"], params["b4"]

    # Pad the batch to a multiple of the tile so every grid step is full.
    num_tiles = pl.cdiv(B, tb)
    Bp = num_tiles * tb
    if Bp != B:
        pad = Bp - B
        s = jnp.pad(s, ((0, pad), (0, 0)))
        a = jnp.pad(a, ((0, pad), (0, 0)))

    weight_args = (w1s, w1a, b1, w2, b2, w3, b3, w4t, b4)
    in_specs = (
        [pl.BlockSpec((tb, state_dim), lambda i: (i, 0)),
         pl.BlockSpec((tb, action_dim), lambda i: (i, 0))]
        + [_resident_spec(w.shape) for w in weight_args]
    )
    out_spec = pl.BlockSpec((tb, 1), lambda i: (i, 0))

    q = pl.pallas_call(
        critic_kernel,
        out_shape=jax.ShapeDtypeStruct((Bp, 1), jnp.float32),
        grid=(num_tiles,),
        in_specs=in_specs,
        out_specs=out_spec,
        compiler_params=pltpu.CompilerParams(
            dimension_semantics=("parallel",),
        ),
    )(s, a, *weight_args)
    return q[:B]


def init_critic_params(key):
    """PyTorch nn.Linear default init (U(+-1/sqrt(fan_in))); weights stored [in, out]."""
    dims = [(STATE_DIM + ACTION_DIM, 300), (300, 200), (200, 200), (200, 1)]
    params = {}
    keys = jax.random.split(key, 2 * len(dims))
    for i, (fan_in, fan_out) in enumerate(dims):
        bound = 1.0 / (fan_in ** 0.5)
        params[f"w{i + 1}"] = jax.random.uniform(
            keys[2 * i], (fan_in, fan_out), minval=-bound, maxval=bound,
            dtype=jnp.float32)
        params[f"b{i + 1}"] = jax.random.uniform(
            keys[2 * i + 1], (1, fan_out), minval=-bound, maxval=bound,
            dtype=jnp.float32)
    return params


def critic_reference(s, a, params):
    """Pure-JAX mirror of the kernel math (same bf16 casts, f32 accumulation)."""
    state_dim = s.shape[1]
    w1 = params["w1"]
    w1s = w1[:state_dim].astype(jnp.bfloat16)
    w1a = w1[state_dim:]
    h = jnp.dot(s.astype(jnp.bfloat16), w1s, preferred_element_type=jnp.float32)
    if a.shape[1] == 1:
        h = h + a * w1a
    else:
        h = h + jnp.dot(a.astype(jnp.bfloat16), w1a.astype(jnp.bfloat16),
                        preferred_element_type=jnp.float32)
    h = jax.nn.relu(h + params["b1"])
    h = jax.nn.relu(jnp.dot(h.astype(jnp.bfloat16),
                            params["w2"].astype(jnp.bfloat16),
                            preferred_element_type=jnp.float32) + params["b2"])
    h = jax.nn.relu(jnp.dot(h.astype(jnp.bfloat16),
                            params["w3"].astype(jnp.bfloat16),
                            preferred_element_type=jnp.float32) + params["b3"])
    q = jnp.sum(h * params["w4"].T, axis=-1, keepdims=True) + params["b4"]
    return q


if __name__ == "__main__":
    key = jax.random.PRNGKey(0)
    pkey, skey, akey = jax.random.split(key, 3)

    params = init_critic_params(pkey)

    B = 8   # small demo batch; the kernel pads/tiles to a 128-multiple internally
    s = jax.random.normal(skey, (B, STATE_DIM), dtype=jnp.float32)
    a = jax.random.normal(akey, (B, ACTION_DIM), dtype=jnp.float32)

    q = critic_forward(s, a, params)
    q = jax.block_until_ready(q)

    ref = critic_reference(s, a, params)
    assert q.shape == (B, 1)
    assert jnp.allclose(q, ref, atol=1e-3, rtol=1e-3), (
        "mismatch vs reference: max abs diff = "
        f"{float(jnp.max(jnp.abs(q - ref)))}")

    print("KERNEL_OK")
</pallas_src>

<mosaic_0001>
module attributes {stable_mosaic.version = 11 : i64} {
  func.func @critic_kernel(%arg0: i32, %arg1: memref<128x7xf32, #tpu.memory_space<vmem>>, %arg2: memref<128x1xf32, #tpu.memory_space<vmem>>, %arg3: memref<7x300xbf16, #tpu.memory_space<vmem>>, %arg4: memref<1x300xf32, #tpu.memory_space<vmem>>, %arg5: memref<1x300xf32, #tpu.memory_space<vmem>>, %arg6: memref<300x200xbf16, #tpu.memory_space<vmem>>, %arg7: memref<1x200xf32, #tpu.memory_space<vmem>>, %arg8: memref<200x200xbf16, #tpu.memory_space<vmem>>, %arg9: memref<1x200xf32, #tpu.memory_space<vmem>>, %arg10: memref<1x200xf32, #tpu.memory_space<vmem>>, %arg11: memref<1x1xf32, #tpu.memory_space<vmem>>, %arg12: memref<128x1xf32, #tpu.memory_space<vmem>>) attributes {dimension_semantics = [#tpu.dimension_semantics<parallel>], iteration_bounds = array<i64: 1>, scalar_prefetch = 0 : i64, scratch_operands = 0 : i64, tpu.core_type = #tpu.core_type<tc>, window_params = [{transform_indices = @transform_0, window_bounds = array<i64: 128, 7>}, {transform_indices = @transform_1, window_bounds = array<i64: 128, 1>}, {pipeline_mode = #tpu.pipeline_mode<synchronous>, transform_indices = @transform_2, window_bounds = array<i64: 7, 300>}, {pipeline_mode = #tpu.pipeline_mode<synchronous>, transform_indices = @transform_3, window_bounds = array<i64: 1, 300>}, {pipeline_mode = #tpu.pipeline_mode<synchronous>, transform_indices = @transform_4, window_bounds = array<i64: 1, 300>}, {pipeline_mode = #tpu.pipeline_mode<synchronous>, transform_indices = @transform_5, window_bounds = array<i64: 300, 200>}, {pipeline_mode = #tpu.pipeline_mode<synchronous>, transform_indices = @transform_6, window_bounds = array<i64: 1, 200>}, {pipeline_mode = #tpu.pipeline_mode<synchronous>, transform_indices = @transform_7, window_bounds = array<i64: 200, 200>}, {pipeline_mode = #tpu.pipeline_mode<synchronous>, transform_indices = @transform_8, window_bounds = array<i64: 1, 200>}, {pipeline_mode = #tpu.pipeline_mode<synchronous>, transform_indices = @transform_9, window_bounds = array<i64: 1, 200>}, {pipeline_mode = #tpu.pipeline_mode<synchronous>, transform_indices = @transform_10, window_bounds = array<i64: 1, 1>}, {transform_indices = @transform_11, window_bounds = array<i64: 128, 1>}]} {
    %c0 = arith.constant 0 : index
    %c0_0 = arith.constant 0 : index
    %0 = vector.load %arg1[%c0, %c0_0] : memref<128x7xf32, #tpu.memory_space<vmem>>, vector<128x7xf32>
    %c0_1 = arith.constant 0 : index
    %c0_2 = arith.constant 0 : index
    %1 = vector.load %arg2[%c0_1, %c0_2] : memref<128x1xf32, #tpu.memory_space<vmem>>, vector<128x1xf32>
    %2 = arith.truncf %0 : vector<128x7xf32> to vector<128x7xbf16>
    %c0_3 = arith.constant 0 : index
    %c0_4 = arith.constant 0 : index
    %3 = vector.load %arg3[%c0_3, %c0_4] : memref<7x300xbf16, #tpu.memory_space<vmem>>, vector<7x300xbf16>
    %cst = arith.constant dense<0.000000e+00> : vector<128x300xf32>
    %4 = tpu.matmul %2, %3, %cst {dimension_numbers = #tpu.dot_dimension_numbers<[1], [0], [0], [1], [0, 0, 1, 1], [], []>} : vector<128x7xbf16>, vector<7x300xbf16>, vector<128x300xf32> -> vector<128x300xf32>
    %c0_5 = arith.constant 0 : index
    %c0_6 = arith.constant 0 : index
    %5 = vector.load %arg4[%c0_5, %c0_6] : memref<1x300xf32, #tpu.memory_space<vmem>>, vector<1x300xf32>
    %6 = vector.broadcast %1 : vector<128x1xf32> to vector<128x300xf32>
    %7 = vector.broadcast %5 : vector<1x300xf32> to vector<128x300xf32>
    %8 = arith.mulf %6, %7 : vector<128x300xf32>
    %9 = arith.addf %4, %8 : vector<128x300xf32>
    %c0_7 = arith.constant 0 : index
    %c0_8 = arith.constant 0 : index
    %10 = vector.load %arg5[%c0_7, %c0_8] : memref<1x300xf32, #tpu.memory_space<vmem>>, vector<1x300xf32>
    %11 = vector.broadcast %10 : vector<1x300xf32> to vector<128x300xf32>
    %12 = arith.addf %9, %11 : vector<128x300xf32>
    %cst_9 = arith.constant 0.000000e+00 : f32
    %13 = vector.broadcast %cst_9 : f32 to vector<128x300xf32>
    %14 = arith.maximumf %12, %13 : vector<128x300xf32>
    %15 = arith.truncf %14 : vector<128x300xf32> to vector<128x300xbf16>
    %c0_10 = arith.constant 0 : index
    %c0_11 = arith.constant 0 : index
    %16 = vector.load %arg6[%c0_10, %c0_11] : memref<300x200xbf16, #tpu.memory_space<vmem>>, vector<300x200xbf16>
    %cst_12 = arith.constant dense<0.000000e+00> : vector<128x200xf32>
    %17 = tpu.matmul %15, %16, %cst_12 {dimension_numbers = #tpu.dot_dimension_numbers<[1], [0], [0], [1], [0, 0, 1, 1], [], []>} : vector<128x300xbf16>, vector<300x200xbf16>, vector<128x200xf32> -> vector<128x200xf32>
    %c0_13 = arith.constant 0 : index
    %c0_14 = arith.constant 0 : index
    %18 = vector.load %arg7[%c0_13, %c0_14] : memref<1x200xf32, #tpu.memory_space<vmem>>, vector<1x200xf32>
    %19 = vector.broadcast %18 : vector<1x200xf32> to vector<128x200xf32>
    %20 = arith.addf %17, %19 : vector<128x200xf32>
    %cst_15 = arith.constant 0.000000e+00 : f32
    %21 = vector.broadcast %cst_15 : f32 to vector<128x200xf32>
    %22 = arith.maximumf %20, %21 : vector<128x200xf32>
    %23 = arith.truncf %22 : vector<128x200xf32> to vector<128x200xbf16>
    %c0_16 = arith.constant 0 : index
    %c0_17 = arith.constant 0 : index
    %24 = vector.load %arg8[%c0_16, %c0_17] : memref<200x200xbf16, #tpu.memory_space<vmem>>, vector<200x200xbf16>
    %cst_18 = arith.constant dense<0.000000e+00> : vector<128x200xf32>
    %25 = tpu.matmul %23, %24, %cst_18 {dimension_numbers = #tpu.dot_dimension_numbers<[1], [0], [0], [1], [0, 0, 1, 1], [], []>} : vector<128x200xbf16>, vector<200x200xbf16>, vector<128x200xf32> -> vector<128x200xf32>
    %c0_19 = arith.constant 0 : index
    %c0_20 = arith.constant 0 : index
    %26 = vector.load %arg9[%c0_19, %c0_20] : memref<1x200xf32, #tpu.memory_space<vmem>>, vector<1x200xf32>
    %27 = vector.broadcast %26 : vector<1x200xf32> to vector<128x200xf32>
    %28 = arith.addf %25, %27 : vector<128x200xf32>
    %cst_21 = arith.constant 0.000000e+00 : f32
    %29 = vector.broadcast %cst_21 : f32 to vector<128x200xf32>
    %30 = arith.maximumf %28, %29 : vector<128x200xf32>
    %c0_22 = arith.constant 0 : index
    %c0_23 = arith.constant 0 : index
    %31 = vector.load %arg10[%c0_22, %c0_23] : memref<1x200xf32, #tpu.memory_space<vmem>>, vector<1x200xf32>
    %32 = vector.broadcast %31 : vector<1x200xf32> to vector<128x200xf32>
    %33 = arith.mulf %30, %32 : vector<128x200xf32>
    %cst_24 = arith.constant dense<0.000000e+00> : vector<128xf32>
    %34 = vector.multi_reduction <add>, %33, %cst_24 [1] : vector<128x200xf32> to vector<128xf32>
    %35 = vector.shape_cast %34 : vector<128xf32> to vector<128x1xf32>
    %c0_25 = arith.constant 0 : index
    %c0_26 = arith.constant 0 : index
    %36 = vector.load %arg11[%c0_25, %c0_26] : memref<1x1xf32, #tpu.memory_space<vmem>>, vector<1x1xf32>
    %37 = vector.broadcast %36 : vector<1x1xf32> to vector<128x1xf32>
    %38 = arith.addf %35, %37 : vector<128x1xf32>
    %c0_27 = arith.constant 0 : index
    %c0_28 = arith.constant 0 : index
    %39 = vector.load %arg12[%c0_27, %c0_28] : memref<128x1xf32, #tpu.memory_space<vmem>>, vector<128x1xf32>
    tpu.vector_store %arg12[%c0_27, %c0_28], %38 {strides = array<i32>} : memref<128x1xf32, #tpu.memory_space<vmem>>, vector<128x1xf32>,
    return
  }
  func.func @transform_0(%arg0: i32) -> (i32, i32) {
    %c0_i32 = arith.constant 0 : i32
    %c0_i32_0 = arith.constant 0 : i32
    return %arg0, %c0_i32 : i32, i32
  }
  func.func @transform_1(%arg0: i32) -> (i32, i32) {
    %c0_i32 = arith.constant 0 : i32
    %c0_i32_0 = arith.constant 0 : i32
    return %arg0, %c0_i32 : i32, i32
  }
  func.func @transform_2(%arg0: i32) -> (i32, i32) {
    %c0_i32 = arith.constant 0 : i32
    %c0_i32_0 = arith.constant 0 : i32
    %c0_i32_1 = arith.constant 0 : i32
    return %c0_i32, %c0_i32_0 : i32, i32
  }
  func.func @transform_3(%arg0: i32) -> (i32, i32) {
    %c0_i32 = arith.constant 0 : i32
    %c0_i32_0 = arith.constant 0 : i32
    %c0_i32_1 = arith.constant 0 : i32
    return %c0_i32, %c0_i32_0 : i32, i32
  }
  func.func @transform_4(%arg0: i32) -> (i32, i32) {
    %c0_i32 = arith.constant 0 : i32
    %c0_i32_0 = arith.constant 0 : i32
    %c0_i32_1 = arith.constant 0 : i32
    return %c0_i32, %c0_i32_0 : i32, i32
  }
  func.func @transform_5(%arg0: i32) -> (i32, i32) {
    %c0_i32 = arith.constant 0 : i32
    %c0_i32_0 = arith.constant 0 : i32
    %c0_i32_1 = arith.constant 0 : i32
    return %c0_i32, %c0_i32_0 : i32, i32
  }
  func.func @transform_6(%arg0: i32) -> (i32, i32) {
    %c0_i32 = arith.constant 0 : i32
    %c0_i32_0 = arith.constant 0 : i32
    %c0_i32_1 = arith.constant 0 : i32
    return %c0_i32, %c0_i32_0 : i32, i32
  }
  func.func @transform_7(%arg0: i32) -> (i32, i32) {
    %c0_i32 = arith.constant 0 : i32
    %c0_i32_0 = arith.constant 0 : i32
    %c0_i32_1 = arith.constant 0 : i32
    return %c0_i32, %c0_i32_0 : i32, i32
  }
  func.func @transform_8(%arg0: i32) -> (i32, i32) {
    %c0_i32 = arith.constant 0 : i32
    %c0_i32_0 = arith.constant 0 : i32
    %c0_i32_1 = arith.constant 0 : i32
    return %c0_i32, %c0_i32_0 : i32, i32
  }
  func.func @transform_9(%arg0: i32) -> (i32, i32) {
    %c0_i32 = arith.constant 0 : i32
    %c0_i32_0 = arith.constant 0 : i32
    %c0_i32_1 = arith.constant 0 : i32
    return %c0_i32, %c0_i32_0 : i32, i32
  }
  func.func @transform_10(%arg0: i32) -> (i32, i32) {
    %c0_i32 = arith.constant 0 : i32
    %c0_i32_0 = arith.constant 0 : i32
    %c0_i32_1 = arith.constant 0 : i32
    return %c0_i32, %c0_i32_0 : i32, i32
  }
  func.func @transform_11(%arg0: i32) -> (i32, i32) {
    %c0_i32 = arith.constant 0 : i32
    %c0_i32_0 = arith.constant 0 : i32
    return %arg0, %c0_i32 : i32, i32
  }
}

</mosaic_0001>

<llo_original>
// kernel: critic_forward.1
$region0: #{critic_forward.1}
  #allocation0 [shape = 'u32[]', space=smem, size = 0x4, offset = 0x4, fixed_abs, tag = 'smem constant byte address 0x4 - core index']
  #allocation1 [shape = 'u32[72,128]{1,0:T(1,128)}', space=vmem, size = 0x9000, scoped, tag = 'internal scratch']
  #allocation2 [shape = 'f32[1,1]{1,0:T(1,128)S(1)}', space=vmem, size = 0x200, scoped, tag = 'scoped memory for critic_forward.1']
  %s0 = inlined_call_operand.vmem [shape: f32[128,7], index: 0, kind: input, shape index: {}]
  %s1 = inlined_call_operand.vmem [shape: f32[128,1], index: 1, kind: input, shape index: {}]
  %s2 = inlined_call_operand.vmem [shape: bf16[7,300], index: 2, kind: input, shape index: {}]
  %s3 = inlined_call_operand.vmem [shape: f32[1,300], index: 3, kind: input, shape index: {}]
  %s4 = inlined_call_operand.vmem [shape: f32[1,300], index: 4, kind: input, shape index: {}]
  %s5 = inlined_call_operand.vmem [shape: bf16[300,200], index: 5, kind: input, shape index: {}]
  %s6 = inlined_call_operand.vmem [shape: f32[1,200], index: 6, kind: input, shape index: {}]
  %s7 = inlined_call_operand.vmem [shape: bf16[200,200], index: 7, kind: input, shape index: {}]
  %s8 = inlined_call_operand.vmem [shape: f32[1,200], index: 8, kind: input, shape index: {}]
  %s9 = inlined_call_operand.vmem [shape: f32[1,200], index: 9, kind: input, shape index: {}]
  %s10 = inlined_call_operand.<no memory space> [shape: f32[1,1], index: 10, kind: input, shape index: {}]
  %s11 = inlined_call_operand.vmem [shape: f32[128,1], index: 11, kind: output, shape index: {}]
  %s12 = sld [smem:[#allocation0]]
  $region54: #{critic_forward.1} parent=0
    _
  %s14 = ssub.s32 1, %s12
  %s15 = scalar_select 0, %s14, %s12
  %v16 = vstv %s10
  %17 = vst [vmem:[#allocation2] sm:$0x1] %v16
  // Predicated region
  $region2: #{critic_forward.1} parent=0 // pred_check
    _
  $region3: #{critic_forward.1} parent=0 // pred_check_branch
    %19 = sbr.rel (0) target = $region5
  $region4: #{critic_forward.1} parent=0 // pred_region
    _
  $region5: #{critic_forward.1} parent=0 // pred_fallthru
    _
  // Predicated region
  $region6: #{critic_forward.1} parent=0 // pred_check
    _
  $region7: #{critic_forward.1} parent=0 // pred_check_branch
    %21 = sbr.rel (0) target = $region9
  $region8: #{critic_forward.1} parent=0 // pred_region
    _
  $region9: #{critic_forward.1} parent=0 // pred_fallthru
    _
  // Predicated region
  $region10: #{critic_forward.1} parent=0 // pred_check
    _
  $region11: #{critic_forward.1} parent=0 // pred_check_branch
    %23 = sbr.rel (0) target = $region13
  $region12: #{critic_forward.1} parent=0 // pred_region
    _
  $region13: #{critic_forward.1} parent=0 // pred_fallthru
    _
  // Predicated region
  $region14: #{critic_forward.1} parent=0 // pred_check
    _
  $region15: #{critic_forward.1} parent=0 // pred_check_branch
    %25 = sbr.rel (0) target = $region17
  $region16: #{critic_forward.1} parent=0 // pred_region
    _
  $region17: #{critic_forward.1} parent=0 // pred_fallthru
    _
  // Predicated region
  $region18: #{critic_forward.1} parent=0 // pred_check
    _
  $region19: #{critic_forward.1} parent=0 // pred_check_branch
    %27 = sbr.rel (0) target = $region21
  $region20: #{critic_forward.1} parent=0 // pred_region
    _
  $region21: #{critic_forward.1} parent=0 // pred_fallthru
    _
  // Predicated region
  $region22: #{critic_forward.1} parent=0 // pred_check
    _
  $region23: #{critic_forward.1} parent=0 // pred_check_branch
    %29 = sbr.rel (0) target = $region25
  $region24: #{critic_forward.1} parent=0 // pred_region
    _
  $region25: #{critic_forward.1} parent=0 // pred_fallthru
    _
  // Predicated region
  $region26: #{critic_forward.1} parent=0 // pred_check
    _
  $region27: #{critic_forward.1} parent=0 // pred_check_branch
    %31 = sbr.rel (0) target = $region29
  $region28: #{critic_forward.1} parent=0 // pred_region
    _
  $region29: #{critic_forward.1} parent=0 // pred_fallthru
    _
  // Predicated region
  $region30: #{critic_forward.1} parent=0 // pred_check
    _
  $region31: #{critic_forward.1} parent=0 // pred_check_branch
    %33 = sbr.rel (0) target = $region33
  $region32: #{critic_forward.1} parent=0 // pred_region
    _
  $region33: #{critic_forward.1} parent=0 // pred_fallthru
    _
  // Predicated region
  $region34: #{critic_forward.1} parent=0 // pred_check
    _
  $region35: #{critic_forward.1} parent=0 // pred_check_branch
    %35 = sbr.rel (0) target = $region37
  $region36: #{critic_forward.1} parent=0 // pred_region
    _
  $region37: #{critic_forward.1} parent=0 // pred_fallthru
    _
  // Predicated region
  $region38: #{critic_forward.1} parent=0 // pred_check
    _
  $region39: #{critic_forward.1} parent=0 // pred_check_branch
    %37 = sbr.rel (0) target = $region41
  $region40: #{critic_forward.1} parent=0 // pred_region
    _
  $region41: #{critic_forward.1} parent=0 // pred_fallthru
    _
  // Predicated region
  $region42: #{critic_forward.1} parent=0 // pred_check
    _
  $region43: #{critic_forward.1} parent=0 // pred_check_branch
    %39 = sbr.rel (0) target = $region45
  $region44: #{critic_forward.1} parent=0 // pred_region
    _
  $region45: #{critic_forward.1} parent=0 // pred_fallthru
    _
  %v41 = vld [vmem:[%s0] sm:$0xff]
  %v42 = vld [vmem:[%s0 + $0x8] sm:$0xff]
  %v43 = vld [vmem:[%s0 + $0x10] sm:$0xff]
  %v44 = vld [vmem:[%s0 + $0x18] sm:$0xff]
  %v45 = vld [vmem:[%s0 + $0x20] sm:$0xff]
  %v46 = vld [vmem:[%s0 + $0x28] sm:$0xff]
  %v47 = vld [vmem:[%s0 + $0x30] sm:$0xff]
  %v48 = vld [vmem:[%s0 + $0x38] sm:$0xff]
  %v49 = vld [vmem:[%s0 + $0x40] sm:$0xff]
  %v50 = vld [vmem:[%s0 + $0x48] sm:$0xff]
  %v51 = vld [vmem:[%s0 + $0x50] sm:$0xff]
  %v52 = vld [vmem:[%s0 + $0x58] sm:$0xff]
  %v53 = vld [vmem:[%s0 + $0x60] sm:$0xff]
  %v54 = vld [vmem:[%s0 + $0x68] sm:$0xff]
  %v55 = vld [vmem:[%s0 + $0x70] sm:$0xff]
  %v56 = vld [vmem:[%s0 + $0x78] sm:$0xff]
  %v57 = vld [vmem:[%s1] sm:$0xff]
  %v58 = vld [vmem:[%s1 + $0x8] sm:$0xff]
  %v59 = vld [vmem:[%s1 + $0x10] sm:$0xff]
  %v60 = vld [vmem:[%s1 + $0x18] sm:$0xff]
  %v61 = vld [vmem:[%s1 + $0x20] sm:$0xff]
  %v62 = vld [vmem:[%s1 + $0x28] sm:$0xff]
  %v63 = vld [vmem:[%s1 + $0x30] sm:$0xff]
  %v64 = vld [vmem:[%s1 + $0x38] sm:$0xff]
  %v65 = vld [vmem:[%s1 + $0x40] sm:$0xff]
  %v66 = vld [vmem:[%s1 + $0x48] sm:$0xff]
  %v67 = vld [vmem:[%s1 + $0x50] sm:$0xff]
  %v68 = vld [vmem:[%s1 + $0x58] sm:$0xff]
  %v69 = vld [vmem:[%s1 + $0x60] sm:$0xff]
  %v70 = vld [vmem:[%s1 + $0x68] sm:$0xff]
  %v71 = vld [vmem:[%s1 + $0x70] sm:$0xff]
  %v72 = vld [vmem:[%s1 + $0x78] sm:$0xff]
  %v73 = vpack.c.bf16 %v42, %v41
  %v74 = vpack.c.bf16 %v44, %v43
  %v75 = vpack.c.bf16 %v46, %v45
  %v76 = vpack.c.bf16 %v48, %v47
  %v77 = vpack.c.bf16 %v50, %v49
  %v78 = vpack.c.bf16 %v52, %v51
  %v79 = vpack.c.bf16 %v54, %v53
  %v80 = vpack.c.bf16 %v56, %v55
  %v81 = vld [vmem:[%s2] sm:$0xff]
  %v82 = vld [vmem:[%s2 + $0x8] sm:$0xf]
  %v83 = vld [vmem:[%s3] sm:$0x7]
  %85 = vset.pattern.permute.xlu0 0
  %86 = vperm.xlu0 %85, %v57
  %v87 = vpop.permute.xlu0 %86
  %90 = vset.pattern.permute.xlu0 0
  %91 = vperm.xlu0 %90, %v58
  %v92 = vpop.permute.xlu0 %91
  %95 = vset.pattern.permute.xlu0 0
  %96 = vperm.xlu0 %95, %v59
  %v97 = vpop.permute.xlu0 %96
  %100 = vset.pattern.permute.xlu0 0
  %101 = vperm.xlu0 %100, %v60
  %v102 = vpop.permute.xlu0 %101
  %105 = vset.pattern.permute.xlu0 0
  %106 = vperm.xlu0 %105, %v61
  %v107 = vpop.permute.xlu0 %106
  %110 = vset.pattern.permute.xlu0 0
  %111 = vperm.xlu0 %110, %v62
  %v112 = vpop.permute.xlu0 %111
  %115 = vset.pattern.permute.xlu0 0
  %116 = vperm.xlu0 %115, %v63
  %v117 = vpop.permute.xlu0 %116
  %120 = vset.pattern.permute.xlu0 0
  %121 = vperm.xlu0 %120, %v64
  %v122 = vpop.permute.xlu0 %121
  %125 = vset.pattern.permute.xlu0 0
  %126 = vperm.xlu0 %125, %v65
  %v127 = vpop.permute.xlu0 %126
  %130 = vset.pattern.permute.xlu0 0
  %131 = vperm.xlu0 %130, %v66
  %v132 = vpop.permute.xlu0 %131
  %135 = vset.pattern.permute.xlu0 0
  %136 = vperm.xlu0 %135, %v67
  %v137 = vpop.permute.xlu0 %136
  %140 = vset.pattern.permute.xlu0 0
  %141 = vperm.xlu0 %140, %v68
  %v142 = vpop.permute.xlu0 %141
  %145 = vset.pattern.permute.xlu0 0
  %146 = vperm.xlu0 %145, %v69
  %v147 = vpop.permute.xlu0 %146
  %150 = vset.pattern.permute.xlu0 0
  %151 = vperm.xlu0 %150, %v70
  %v152 = vpop.permute.xlu0 %151
  %155 = vset.pattern.permute.xlu0 0
  %156 = vperm.xlu0 %155, %v71
  %v157 = vpop.permute.xlu0 %156
  %160 = vset.pattern.permute.xlu0 0
  %161 = vperm.xlu0 %160, %v72
  %v162 = vpop.permute.xlu0 %161
  %v165 = vperm.slane %v83, 0
  %v166 = vperm.slane %v83, 1
  %v167 = vperm.slane %v83, 2
  %v171 = vmul.f32 %v87, %v165
  %v172 = vmul.f32 %v87, %v166
  %v173 = vmul.f32 %v87, %v167
  %v174 = vmul.f32 %v92, %v165
  %v175 = vmul.f32 %v92, %v166
  %v176 = vmul.f32 %v92, %v167
  %v177 = vmul.f32 %v97, %v165
  %v178 = vmul.f32 %v97, %v166
  %v179 = vmul.f32 %v97, %v167
  %v180 = vmul.f32 %v102, %v165
  %v181 = vmul.f32 %v102, %v166
  %v182 = vmul.f32 %v102, %v167
  %v183 = vmul.f32 %v107, %v165
  %v184 = vmul.f32 %v107, %v166
  %v185 = vmul.f32 %v107, %v167
  %v186 = vmul.f32 %v112, %v165
  %v187 = vmul.f32 %v112, %v166
  %v188 = vmul.f32 %v112, %v167
  %v189 = vmul.f32 %v117, %v165
  %v190 = vmul.f32 %v117, %v166
  %v191 = vmul.f32 %v117, %v167
  %v192 = vmul.f32 %v122, %v165
  %v193 = vmul.f32 %v122, %v166
  %v194 = vmul.f32 %v122, %v167
  %v195 = vmul.f32 %v127, %v165
  %v196 = vmul.f32 %v127, %v166
  %v197 = vmul.f32 %v127, %v167
  %v198 = vmul.f32 %v132, %v165
  %v199 = vmul.f32 %v132, %v166
  %v200 = vmul.f32 %v132, %v167
  %v201 = vmul.f32 %v137, %v165
  %v202 = vmul.f32 %v137, %v166
  %v203 = vmul.f32 %v137, %v167
  %v204 = vmul.f32 %v142, %v165
  %v205 = vmul.f32 %v142, %v166
  %v206 = vmul.f32 %v142, %v167
  %v207 = vmul.f32 %v147, %v165
  %v208 = vmul.f32 %v147, %v166
  %v209 = vmul.f32 %v147, %v167
  %v210 = vmul.f32 %v152, %v165
  %v211 = vmul.f32 %v152, %v166
  %v212 = vmul.f32 %v152, %v167
  %v213 = vmul.f32 %v157, %v165
  %v214 = vmul.f32 %v157, %v166
  %v215 = vmul.f32 %v157, %v167
  %v216 = vmul.f32 %v162, %v165
  %v217 = vmul.f32 %v162, %v166
  %v218 = vmul.f32 %v162, %v167
  %v221 = vunpack.c.l.b16 %v81
  %v222 = vunpack.c.h.b16 %v81
  %v223 = vunpack.c.l.b16 %v82
  %v224 = vpack.c.b16 %v221, %v221
  %v225 = vpack.c.b16 %v222, %v222
  %v226 = vpack.c.b16 %v223, %v223
  %vm227 = vcmask 56320
  %v229 = vsel %vm227, %v73, 0
  %v232 = vsel %vm227, %v74, 0
  %v235 = vsel %vm227, %v75, 0
  %v238 = vsel %vm227, %v76, 0
  %v241 = vsel %vm227, %v77, 0
  %v244 = vsel %vm227, %v78, 0
  %v247 = vsel %vm227, %v79, 0
  %v250 = vsel %vm227, %v80, 0
  %vm252 = vcmask 1042432
  %vm253 = vcmask 1043456
  %v254 = vsel %vm252, 4294967295, 65535
  %v255 = vsel %vm253, %v254, 0
  %v257 = vand.u32 %v224, %v255
  %v260 = vand.u32 %v225, %v255
  %v263 = vand.u32 %v226, %v255
  %265 = vmatpush.bf16.msra.mxu0 0
  %266 = vmatpush.bf16.msra.mxu0 0
  %267 = vmatpush.bf16.msra.mxu0 0
  %268 = vmatpush.bf16.msra.mxu0 0
  %269 = vmatpush.bf16.msra.mxu0 0
  %270 = vmatpush.bf16.msra.mxu0 0
  %271 = vmatpush.bf16.msra.mxu0 0
  %272 = vmatpush.bf16.msra.mxu0 %v257
  %273 = vmatmul.bf16.gmra.mxu0 %v229
  %v274 = vpop.f32.mrf.mxu0
  %v275 = vadd.f32 %v171, %v274
  %v276 = vpop.f32.mrf.mxu0
  %v277 = vadd.f32 %v174, %v276
  %278 = vmatmul.bf16.gmra.mxu0 %v232
  %v279 = vpop.f32.mrf.mxu0
  %v280 = vadd.f32 %v177, %v279
  %v281 = vpop.f32.mrf.mxu0
  %v282 = vadd.f32 %v180, %v281
  %283 = vmatmul.bf16.gmra.mxu0 %v235
  %v284 = vpop.f32.mrf.mxu0
  %v285 = vadd.f32 %v183, %v284
  %v286 = vpop.f32.mrf.mxu0
  %v287 = vadd.f32 %v186, %v286
  %288 = vmatmul.bf16.gmra.mxu0 %v238
  %v289 = vpop.f32.mrf.mxu0
  %v290 = vadd.f32 %v189, %v289
  %v291 = vpop.f32.mrf.mxu0
  %v292 = vadd.f32 %v192, %v291
  %293 = vmatmul.bf16.gmra.mxu0 %v241
  %v294 = vpop.f32.mrf.mxu0
  %v295 = vadd.f32 %v195, %v294
  %v296 = vpop.f32.mrf.mxu0
  %v297 = vadd.f32 %v198, %v296
  %298 = vmatmul.bf16.gmra.mxu0 %v244
  %v299 = vpop.f32.mrf.mxu0
  %v300 = vadd.f32 %v201, %v299
  %v301 = vpop.f32.mrf.mxu0
  %v302 = vadd.f32 %v204, %v301
  %303 = vmatmul.bf16.gmra.mxu0 %v247
  %v304 = vpop.f32.mrf.mxu0
  %v305 = vadd.f32 %v207, %v304
  %v306 = vpop.f32.mrf.mxu0
  %v307 = vadd.f32 %v210, %v306
  %308 = vmatmul.bf16.gmra.mxu0 %v250
  %v309 = vpop.f32.mrf.mxu0
  %v310 = vadd.f32 %v213, %v309
  %v311 = vpop.f32.mrf.mxu0
  %v312 = vadd.f32 %v216, %v311
  %313 = vdwg.mxu0
  %314 = vmatpush.bf16.msra.mxu0 0
  %315 = vmatpush.bf16.msra.mxu0 0
  %316 = vmatpush.bf16.msra.mxu0 0
  %317 = vmatpush.bf16.msra.mxu0 0
  %318 = vmatpush.bf16.msra.mxu0 0
  %319 = vmatpush.bf16.msra.mxu0 0
  %320 = vmatpush.bf16.msra.mxu0 0
  %321 = vmatpush.bf16.msra.mxu0 %v260
  %322 = vmatmul.bf16.gmra.mxu0 %v229
  %v323 = vpop.f32.mrf.mxu0
  %v324 = vadd.f32 %v172, %v323
  %v325 = vpop.f32.mrf.mxu0
  %v326 = vadd.f32 %v175, %v325
  %327 = vmatmul.bf16.gmra.mxu0 %v232
  %v328 = vpop.f32.mrf.mxu0
  %v329 = vadd.f32 %v178, %v328
  %v330 = vpop.f32.mrf.mxu0
  %v331 = vadd.f32 %v181, %v330
  %332 = vmatmul.bf16.gmra.mxu0 %v235
  %v333 = vpop.f32.mrf.mxu0
  %v334 = vadd.f32 %v184, %v333
  %v335 = vpop.f32.mrf.mxu0
  %v336 = vadd.f32 %v187, %v335
  %337 = vmatmul.bf16.gmra.mxu0 %v238
  %v338 = vpop.f32.mrf.mxu0
  %v339 = vadd.f32 %v190, %v338
  %v340 = vpop.f32.mrf.mxu0
  %v341 = vadd.f32 %v193, %v340
  %342 = vmatmul.bf16.gmra.mxu0 %v241
  %v343 = vpop.f32.mrf.mxu0
  %v344 = vadd.f32 %v196, %v343
  %v345 = vpop.f32.mrf.mxu0
  %v346 = vadd.f32 %v199, %v345
  %347 = vmatmul.bf16.gmra.mxu0 %v244
  %v348 = vpop.f32.mrf.mxu0
  %v349 = vadd.f32 %v202, %v348
  %v350 = vpop.f32.mrf.mxu0
  %v351 = vadd.f32 %v205, %v350
  %352 = vmatmul.bf16.gmra.mxu0 %v247
  %v353 = vpop.f32.mrf.mxu0
  %v354 = vadd.f32 %v208, %v353
  %v355 = vpop.f32.mrf.mxu0
  %v356 = vadd.f32 %v211, %v355
  %357 = vmatmul.bf16.gmra.mxu0 %v250
  %v358 = vpop.f32.mrf.mxu0
  %v359 = vadd.f32 %v214, %v358
  %v360 = vpop.f32.mrf.mxu0
  %v361 = vadd.f32 %v217, %v360
  %362 = vdwg.mxu0
  %363 = vmatpush.bf16.msra.mxu0 0
  %364 = vmatpush.bf16.msra.mxu0 0
  %365 = vmatpush.bf16.msra.mxu0 0
  %366 = vmatpush.bf16.msra.mxu0 0
  %367 = vmatpush.bf16.msra.mxu0 0
  %368 = vmatpush.bf16.msra.mxu0 0
  %369 = vmatpush.bf16.msra.mxu0 0
  %370 = vmatpush.bf16.msra.mxu0 %v263
  %371 = vmatmul.bf16.gmra.mxu0 %v229
  %v372 = vpop.f32.mrf.mxu0
  %v373 = vadd.f32 %v173, %v372
  %v374 = vpop.f32.mrf.mxu0
  %v375 = vadd.f32 %v176, %v374
  %376 = vmatmul.bf16.gmra.mxu0 %v232
  %v377 = vpop.f32.mrf.mxu0
  %v378 = vadd.f32 %v179, %v377
  %v379 = vpop.f32.mrf.mxu0
  %v380 = vadd.f32 %v182, %v379
  %381 = vmatmul.bf16.gmra.mxu0 %v235
  %v382 = vpop.f32.mrf.mxu0
  %v383 = vadd.f32 %v185, %v382
  %v384 = vpop.f32.mrf.mxu0
  %v385 = vadd.f32 %v188, %v384
  %386 = vmatmul.bf16.gmra.mxu0 %v238
  %v387 = vpop.f32.mrf.mxu0
  %v388 = vadd.f32 %v191, %v387
  %v389 = vpop.f32.mrf.mxu0
  %v390 = vadd.f32 %v194, %v389
  %391 = vmatmul.bf16.gmra.mxu0 %v241
  %v392 = vpop.f32.mrf.mxu0
  %v393 = vadd.f32 %v197, %v392
  %v394 = vpop.f32.mrf.mxu0
  %v395 = vadd.f32 %v200, %v394
  %396 = vmatmul.bf16.gmra.mxu0 %v244
  %v397 = vpop.f32.mrf.mxu0
  %v398 = vadd.f32 %v203, %v397
  %v399 = vpop.f32.mrf.mxu0
  %v400 = vadd.f32 %v206, %v399
  %401 = vmatmul.bf16.gmra.mxu0 %v247
  %v402 = vpop.f32.mrf.mxu0
  %v403 = vadd.f32 %v209, %v402
  %v404 = vpop.f32.mrf.mxu0
  %v405 = vadd.f32 %v212, %v404
  %406 = vmatmul.bf16.gmra.mxu0 %v250
  %v407 = vpop.f32.mrf.mxu0
  %v408 = vadd.f32 %v215, %v407
  %v409 = vpop.f32.mrf.mxu0
  %v410 = vadd.f32 %v218, %v409
  %411 = vdwg.mxu0
  %v412 = vld [vmem:[%s4] sm:$0x7]
  %v414 = vperm.slane %v412, 0
  %v415 = vperm.slane %v412, 1
  %v416 = vperm.slane %v412, 2
  %v420 = vadd.f32 %v275, %v414
  %v421 = vadd.f32 %v324, %v415
  %v422 = vadd.f32 %v373, %v416
  %v423 = vadd.f32 %v277, %v414
  %v424 = vadd.f32 %v326, %v415
  %v425 = vadd.f32 %v375, %v416
  %v426 = vadd.f32 %v280, %v414
  %v427 = vadd.f32 %v329, %v415
  %v428 = vadd.f32 %v378, %v416
  %v429 = vadd.f32 %v282, %v414
  %v430 = vadd.f32 %v331, %v415
  %v431 = vadd.f32 %v380, %v416
  %v432 = vadd.f32 %v285, %v414
  %v433 = vadd.f32 %v334, %v415
  %v434 = vadd.f32 %v383, %v416
  %v435 = vadd.f32 %v287, %v414
  %v436 = vadd.f32 %v336, %v415
  %v437 = vadd.f32 %v385, %v416
  %v438 = vadd.f32 %v290, %v414
  %v439 = vadd.f32 %v339, %v415
  %v440 = vadd.f32 %v388, %v416
  %v441 = vadd.f32 %v292, %v414
  %v442 = vadd.f32 %v341, %v415
  %v443 = vadd.f32 %v390, %v416
  %v444 = vadd.f32 %v295, %v414
  %v445 = vadd.f32 %v344, %v415
  %v446 = vadd.f32 %v393, %v416
  %v447 = vadd.f32 %v297, %v414
  %v448 = vadd.f32 %v346, %v415
  %v449 = vadd.f32 %v395, %v416
  %v450 = vadd.f32 %v300, %v414
  %v451 = vadd.f32 %v349, %v415
  %v452 = vadd.f32 %v398, %v416
  %v453 = vadd.f32 %v302, %v414
  %v454 = vadd.f32 %v351, %v415
  %v455 = vadd.f32 %v400, %v416
  %v456 = vadd.f32 %v305, %v414
  %v457 = vadd.f32 %v354, %v415
  %v458 = vadd.f32 %v403, %v416
  %v459 = vadd.f32 %v307, %v414
  %v460 = vadd.f32 %v356, %v415
  %v461 = vadd.f32 %v405, %v416
  %v462 = vadd.f32 %v310, %v414
  %v463 = vadd.f32 %v359, %v415
  %v464 = vadd.f32 %v408, %v416
  %v465 = vadd.f32 %v312, %v414
  %v466 = vadd.f32 %v361, %v415
  %v467 = vadd.f32 %v410, %v416
  %v468 = vmax.f32 %v420, 0.0
  %v469 = vmax.f32 %v421, 0.0
  %v470 = vmax.f32 %v422, 0.0
  %v471 = vmax.f32 %v423, 0.0
  %v472 = vmax.f32 %v424, 0.0
  %v473 = vmax.f32 %v425, 0.0
  %v474 = vmax.f32 %v426, 0.0
  %v475 = vmax.f32 %v427, 0.0
  %v476 = vmax.f32 %v428, 0.0
  %v477 = vmax.f32 %v429, 0.0
  %v478 = vmax.f32 %v430, 0.0
  %v479 = vmax.f32 %v431, 0.0
  %v480 = vmax.f32 %v432, 0.0
  %v481 = vmax.f32 %v433, 0.0
  %v482 = vmax.f32 %v434, 0.0
  %v483 = vmax.f32 %v435, 0.0
  %v484 = vmax.f32 %v436, 0.0
  %v485 = vmax.f32 %v437, 0.0
  %v486 = vmax.f32 %v438, 0.0
  %v487 = vmax.f32 %v439, 0.0
  %v488 = vmax.f32 %v440, 0.0
  %v489 = vmax.f32 %v441, 0.0
  %v490 = vmax.f32 %v442, 0.0
  %v491 = vmax.f32 %v443, 0.0
  %v492 = vmax.f32 %v444, 0.0
  %v493 = vmax.f32 %v445, 0.0
  %v494 = vmax.f32 %v446, 0.0
  %v495 = vmax.f32 %v447, 0.0
  %v496 = vmax.f32 %v448, 0.0
  %v497 = vmax.f32 %v449, 0.0
  %v498 = vmax.f32 %v450, 0.0
  %v499 = vmax.f32 %v451, 0.0
  %v500 = vmax.f32 %v452, 0.0
  %v501 = vmax.f32 %v453, 0.0
  %v502 = vmax.f32 %v454, 0.0
  %v503 = vmax.f32 %v455, 0.0
  %v504 = vmax.f32 %v456, 0.0
  %v505 = vmax.f32 %v457, 0.0
  %v506 = vmax.f32 %v458, 0.0
  %v507 = vmax.f32 %v459, 0.0
  %v508 = vmax.f32 %v460, 0.0
  %v509 = vmax.f32 %v461, 0.0
  %v510 = vmax.f32 %v462, 0.0
  %v511 = vmax.f32 %v463, 0.0
  %v512 = vmax.f32 %v464, 0.0
  %v513 = vmax.f32 %v465, 0.0
  %v514 = vmax.f32 %v466, 0.0
  %v515 = vmax.f32 %v467, 0.0
  %v516 = vpack.c.bf16 %v471, %v468
  %v517 = vpack.c.bf16 %v472, %v469
  %v518 = vpack.c.bf16 %v473, %v470
  %v519 = vpack.c.bf16 %v477, %v474
  %v520 = vpack.c.bf16 %v478, %v475
  %v521 = vpack.c.bf16 %v479, %v476
  %v522 = vpack.c.bf16 %v483, %v480
  %v523 = vpack.c.bf16 %v484, %v481
  %v524 = vpack.c.bf16 %v485, %v482
  %v525 = vpack.c.bf16 %v489, %v486
  %v526 = vpack.c.bf16 %v490, %v487
  %v527 = vpack.c.bf16 %v491, %v488
  %v528 = vpack.c.bf16 %v495, %v492
  %v529 = vpack.c.bf16 %v496, %v493
  %v530 = vpack.c.bf16 %v497, %v494
  %v531 = vpack.c.bf16 %v501, %v498
  %v532 = vpack.c.bf16 %v502, %v499
  %v533 = vpack.c.bf16 %v503, %v500
  %v534 = vpack.c.bf16 %v507, %v504
  %v535 = vpack.c.bf16 %v508, %v505
  %v536 = vpack.c.bf16 %v509, %v506
  %v537 = vpack.c.bf16 %v513, %v510
  %v538 = vpack.c.bf16 %v514, %v511
  %v539 = vpack.c.bf16 %v515, %v512
  %v540 = vld [vmem:[%s5] sm:$0xff]
  %v541 = vld [vmem:[%s5 + $0x8] sm:$0xff]
  %v542 = vld [vmem:[%s5 + $0x10] sm:$0xff]
  %v543 = vld [vmem:[%s5 + $0x18] sm:$0xff]
  %v544 = vld [vmem:[%s5 + $0x20] sm:$0xff]
  %v545 = vld [vmem:[%s5 + $0x28] sm:$0xff]
  %v546 = vld [vmem:[%s5 + $0x30] sm:$0xff]
  %v547 = vld [vmem:[%s5 + $0x38] sm:$0xff]
  %v548 = vld [vmem:[%s5 + $0x40] sm:$0xff]
  %v549 = vld [vmem:[%s5 + $0x48] sm:$0xff]
  %v550 = vld [vmem:[%s5 + $0x50] sm:$0xff]
  %v551 = vld [vmem:[%s5 + $0x58] sm:$0xff]
  %v552 = vld [vmem:[%s5 + $0x60] sm:$0xff]
  %v553 = vld [vmem:[%s5 + $0x68] sm:$0xff]
  %v554 = vld [vmem:[%s5 + $0x70] sm:$0xff]
  %v555 = vld [vmem:[%s5 + $0x78] sm:$0xff]
  %v556 = vld [vmem:[%s5 + $0x80] sm:$0xff]
  %v557 = vld [vmem:[%s5 + $0x88] sm:$0xff]
  %v558 = vld [vmem:[%s5 + $0x90] sm:$0xff]
  %v559 = vld [vmem:[%s5 + $0x98] sm:$0xff]
  %v560 = vld [vmem:[%s5 + $0xa0] sm:$0xff]
  %v561 = vld [vmem:[%s5 + $0xa8] sm:$0xff]
  %v562 = vld [vmem:[%s5 + $0xb0] sm:$0xff]
  %v563 = vld [vmem:[%s5 + $0xb8] sm:$0xff]
  %v564 = vld [vmem:[%s5 + $0xc0] sm:$0xff]
  %v565 = vld [vmem:[%s5 + $0xc8] sm:$0xff]
  %v566 = vld [vmem:[%s5 + $0xd0] sm:$0xff]
  %v567 = vld [vmem:[%s5 + $0xd8] sm:$0xff]
  %v568 = vld [vmem:[%s5 + $0xe0] sm:$0xff]
  %v569 = vld [vmem:[%s5 + $0xe8] sm:$0xff]
  %v570 = vld [vmem:[%s5 + $0xf0] sm:$0xff]
  %v571 = vld [vmem:[%s5 + $0xf8] sm:$0xff]
  %v572 = vld [vmem:[%s5 + $0x100] sm:$0xff]
  %v573 = vld [vmem:[%s5 + $0x108] sm:$0xff]
  %v574 = vld [vmem:[%s5 + $0x110] sm:$0xff]
  %v575 = vld [vmem:[%s5 + $0x118] sm:$0xff]
  %v576 = vld [vmem:[%s5 + $0x120] sm:$0xff]
  %v577 = vld [vmem:[%s5 + $0x128] sm:$0x33]
  %v578 = vld [vmem:[%s6] sm:$0x3]
  %v580 = vperm.slane %v578, 0
  %v581 = vperm.slane %v578, 1
  %v622 = vunpack.c.l.b16 %v540
  %v623 = vunpack.c.h.b16 %v540
  %v624 = vunpack.c.l.b16 %v541
  %v625 = vunpack.c.h.b16 %v541
  %v626 = vunpack.c.l.b16 %v542
  %v627 = vunpack.c.h.b16 %v542
  %v628 = vunpack.c.l.b16 %v543
  %v629 = vunpack.c.h.b16 %v543
  %v630 = vunpack.c.l.b16 %v544
  %v631 = vunpack.c.h.b16 %v544
  %v632 = vunpack.c.l.b16 %v545
  %v633 = vunpack.c.h.b16 %v545
  %v634 = vunpack.c.l.b16 %v546
  %v635 = vunpack.c.h.b16 %v546
  %v636 = vunpack.c.l.b16 %v547
  %v637 = vunpack.c.h.b16 %v547
  %v638 = vunpack.c.l.b16 %v548
  %v639 = vunpack.c.h.b16 %v548
  %v640 = vunpack.c.l.b16 %v549
  %v641 = vunpack.c.h.b16 %v549
  %v642 = vunpack.c.l.b16 %v550
  %v643 = vunpack.c.h.b16 %v550
  %v644 = vunpack.c.l.b16 %v551
  %v645 = vunpack.c.h.b16 %v551
  %v646 = vunpack.c.l.b16 %v552
  %v647 = vunpack.c.h.b16 %v552
  %v648 = vunpack.c.l.b16 %v553
  %v649 = vunpack.c.h.b16 %v553
  %v650 = vunpack.c.l.b16 %v554
  %v651 = vunpack.c.h.b16 %v554
  %v652 = vunpack.c.l.b16 %v555
  %v653 = vunpack.c.h.b16 %v555
  %v654 = vunpack.c.l.b16 %v556
  %v655 = vunpack.c.h.b16 %v556
  %v656 = vunpack.c.l.b16 %v557
  %v657 = vunpack.c.h.b16 %v557
  %v658 = vunpack.c.l.b16 %v558
  %v659 = vunpack.c.h.b16 %v558
  %v660 = vunpack.c.l.b16 %v559
  %v661 = vunpack.c.h.b16 %v559
  %v662 = vunpack.c.l.b16 %v560
  %v663 = vunpack.c.h.b16 %v560
  %v664 = vunpack.c.l.b16 %v561
  %v665 = vunpack.c.h.b16 %v561
  %v666 = vunpack.c.l.b16 %v562
  %v667 = vunpack.c.h.b16 %v562
  %v668 = vunpack.c.l.b16 %v563
  %v669 = vunpack.c.h.b16 %v563
  %v670 = vunpack.c.l.b16 %v564
  %v671 = vunpack.c.h.b16 %v564
  %v672 = vunpack.c.l.b16 %v565
  %v673 = vunpack.c.h.b16 %v565
  %v674 = vunpack.c.l.b16 %v566
  %v675 = vunpack.c.h.b16 %v566
  %v676 = vunpack.c.l.b16 %v567
  %v677 = vunpack.c.h.b16 %v567
  %v678 = vunpack.c.l.b16 %v568
  %v679 = vunpack.c.h.b16 %v568
  %v680 = vunpack.c.l.b16 %v569
  %v681 = vunpack.c.h.b16 %v569
  %v682 = vunpack.c.l.b16 %v570
  %v683 = vunpack.c.h.b16 %v570
  %v684 = vunpack.c.l.b16 %v571
  %v685 = vunpack.c.h.b16 %v571
  %v686 = vunpack.c.l.b16 %v572
  %v687 = vunpack.c.h.b16 %v572
  %v688 = vunpack.c.l.b16 %v573
  %v689 = vunpack.c.h.b16 %v573
  %v690 = vunpack.c.l.b16 %v574
  %v691 = vunpack.c.h.b16 %v574
  %v692 = vunpack.c.l.b16 %v575
  %v693 = vunpack.c.h.b16 %v575
  %v694 = vunpack.c.l.b16 %v576
  %v695 = vunpack.c.h.b16 %v576
  %v696 = vunpack.c.l.b16 %v577
  %v697 = vunpack.c.h.b16 %v577
  %v698 = vpack.c.b16 %v624, %v622
  %v699 = vpack.c.b16 %v625, %v623
  %v700 = vpack.c.b16 %v628, %v626
  %v701 = vpack.c.b16 %v629, %v627
  %v702 = vpack.c.b16 %v632, %v630
  %v703 = vpack.c.b16 %v633, %v631
  %v704 = vpack.c.b16 %v636, %v634
  %v705 = vpack.c.b16 %v637, %v635
  %v706 = vpack.c.b16 %v640, %v638
  %v707 = vpack.c.b16 %v641, %v639
  %v708 = vpack.c.b16 %v644, %v642
  %v709 = vpack.c.b16 %v645, %v643
  %v710 = vpack.c.b16 %v648, %v646
  %v711 = vpack.c.b16 %v649, %v647
  %v712 = vpack.c.b16 %v652, %v650
  %v713 = vpack.c.b16 %v653, %v651
  %v714 = vpack.c.b16 %v656, %v654
  %v715 = vpack.c.b16 %v657, %v655
  %v716 = vpack.c.b16 %v660, %v658
  %v717 = vpack.c.b16 %v661, %v659
  %v718 = vpack.c.b16 %v664, %v662
  %v719 = vpack.c.b16 %v665, %v663
  %v720 = vpack.c.b16 %v668, %v666
  %v721 = vpack.c.b16 %v669, %v667
  %v722 = vpack.c.b16 %v672, %v670
  %v723 = vpack.c.b16 %v673, %v671
  %v724 = vpack.c.b16 %v676, %v674
  %v725 = vpack.c.b16 %v677, %v675
  %v726 = vpack.c.b16 %v680, %v678
  %v727 = vpack.c.b16 %v681, %v679
  %v728 = vpack.c.b16 %v684, %v682
  %v729 = vpack.c.b16 %v685, %v683
  %v730 = vpack.c.b16 %v688, %v686
  %v731 = vpack.c.b16 %v689, %v687
  %v732 = vpack.c.b16 %v692, %v690
  %v733 = vpack.c.b16 %v693, %v691
  %v734 = vpack.c.b16 %v696, %v694
  %v735 = vpack.c.b16 %v697, %v695
  %vm772 = vcmask 359424
  %v774 = vsel %vm772, %v518, 0
  %v777 = vsel %vm772, %v521, 0
  %v780 = vsel %vm772, %v524, 0
  %v783 = vsel %vm772, %v527, 0
  %v786 = vsel %vm772, %v530, 0
  %v789 = vsel %vm772, %v533, 0
  %v792 = vsel %vm772, %v536, 0
  %v795 = vsel %vm772, %v539, 0
  %vm797 = vcmask 1045504
  %v799 = vsel %vm797, %v734, 0
  %v802 = vsel %vm797, %v735, 0
  %804 = vmatpush.bf16.msra.mxu0 %v712
  %805 = vmatpush.bf16.msra.mxu0 %v710
  %806 = vmatpush.bf16.msra.mxu0 %v708
  %807 = vmatpush.bf16.msra.mxu0 %v706
  %808 = vmatpush.bf16.msra.mxu0 %v704
  %809 = vmatpush.bf16.msra.mxu0 %v702
  %810 = vmatpush.bf16.msra.mxu0 %v700
  %811 = vmatpush.bf16.msra.mxu0 %v698
  %812 = vmatmul.bf16.gmra.mxu0 %v516
  %v813 = vpop.f32.mrf.mxu0
  %v814 = vadd.f32 %v580, %v813
  %v815 = vpop.f32.mrf.mxu0
  %v816 = vadd.f32 %v580, %v815
  %817 = vmatmul.bf16.gmra.mxu0 %v519
  %v818 = vpop.f32.mrf.mxu0
  %v819 = vadd.f32 %v580, %v818
  %v820 = vpop.f32.mrf.mxu0
  %v821 = vadd.f32 %v580, %v820
  %822 = vmatmul.bf16.gmra.mxu0 %v522
  %v823 = vpop.f32.mrf.mxu0
  %v824 = vadd.f32 %v580, %v823
  %v825 = vpop.f32.mrf.mxu0
  %v826 = vadd.f32 %v580, %v825
  %827 = vmatmul.bf16.gmra.mxu0 %v525
  %v828 = vpop.f32.mrf.mxu0
  %v829 = vadd.f32 %v580, %v828
  %v830 = vpop.f32.mrf.mxu0
  %v831 = vadd.f32 %v580, %v830
  %832 = vmatmul.bf16.gmra.mxu0 %v528
  %v833 = vpop.f32.mrf.mxu0
  %v834 = vadd.f32 %v580, %v833
  %v835 = vpop.f32.mrf.mxu0
  %v836 = vadd.f32 %v580, %v835
  %837 = vmatmul.bf16.gmra.mxu0 %v531
  %v838 = vpop.f32.mrf.mxu0
  %v839 = vadd.f32 %v580, %v838
  %v840 = vpop.f32.mrf.mxu0
  %v841 = vadd.f32 %v580, %v840
  %842 = vmatmul.bf16.gmra.mxu0 %v534
  %v843 = vpop.f32.mrf.mxu0
  %v844 = vadd.f32 %v580, %v843
  %v845 = vpop.f32.mrf.mxu0
  %v846 = vadd.f32 %v580, %v845
  %847 = vmatmul.bf16.gmra.mxu0 %v537
  %v848 = vpop.f32.mrf.mxu0
  %v849 = vadd.f32 %v580, %v848
  %v850 = vpop.f32.mrf.mxu0
  %v851 = vadd.f32 %v580, %v850
  %852 = vdwg.mxu0
  %853 = vmatpush.bf16.msra.mxu0 %v728
  %854 = vmatpush.bf16.msra.mxu0 %v726
  %855 = vmatpush.bf16.msra.mxu0 %v724
  %856 = vmatpush.bf16.msra.mxu0 %v722
  %857 = vmatpush.bf16.msra.mxu0 %v720
  %858 = vmatpush.bf16.msra.mxu0 %v718
  %859 = vmatpush.bf16.msra.mxu0 %v716
  %860 = vmatpush.bf16.msra.mxu0 %v714
  %861 = vmatmul.bf16.gmra.mxu0 %v517
  %v862 = vpop.f32.mrf.mxu0
  %v863 = vadd.f32 %v814, %v862
  %v864 = vpop.f32.mrf.mxu0
  %v865 = vadd.f32 %v816, %v864
  %866 = vmatmul.bf16.gmra.mxu0 %v520
  %v867 = vpop.f32.mrf.mxu0
  %v868 = vadd.f32 %v819, %v867
  %v869 = vpop.f32.mrf.mxu0
  %v870 = vadd.f32 %v821, %v869
  %871 = vmatmul.bf16.gmra.mxu0 %v523
  %v872 = vpop.f32.mrf.mxu0
  %v873 = vadd.f32 %v824, %v872
  %v874 = vpop.f32.mrf.mxu0
  %v875 = vadd.f32 %v826, %v874
  %876 = vmatmul.bf16.gmra.mxu0 %v526
  %v877 = vpop.f32.mrf.mxu0
  %v878 = vadd.f32 %v829, %v877
  %v879 = vpop.f32.mrf.mxu0
  %v880 = vadd.f32 %v831, %v879
  %881 = vmatmul.bf16.gmra.mxu0 %v529
  %v882 = vpop.f32.mrf.mxu0
  %v883 = vadd.f32 %v834, %v882
  %v884 = vpop.f32.mrf.mxu0
  %v885 = vadd.f32 %v836, %v884
  %886 = vmatmul.bf16.gmra.mxu0 %v532
  %v887 = vpop.f32.mrf.mxu0
  %v888 = vadd.f32 %v839, %v887
  %v889 = vpop.f32.mrf.mxu0
  %v890 = vadd.f32 %v841, %v889
  %891 = vmatmul.bf16.gmra.mxu0 %v535
  %v892 = vpop.f32.mrf.mxu0
  %v893 = vadd.f32 %v844, %v892
  %v894 = vpop.f32.mrf.mxu0
  %v895 = vadd.f32 %v846, %v894
  %896 = vmatmul.bf16.gmra.mxu0 %v538
  %v897 = vpop.f32.mrf.mxu0
  %v898 = vadd.f32 %v849, %v897
  %v899 = vpop.f32.mrf.mxu0
  %v900 = vadd.f32 %v851, %v899
  %901 = vdwg.mxu0
  %902 = vmatpush.bf16.msra.mxu0 0
  %903 = vmatpush.bf16.msra.mxu0 0
  %904 = vmatpush.bf16.msra.mxu0 0
  %905 = vmatpush.bf16.msra.mxu0 0
  %906 = vmatpush.bf16.msra.mxu0 0
  %907 = vmatpush.bf16.msra.mxu0 %v799
  %908 = vmatpush.bf16.msra.mxu0 %v732
  %909 = vmatpush.bf16.msra.mxu0 %v730
  %910 = vmatmul.bf16.gmra.mxu0 %v774
  %v911 = vpop.f32.mrf.mxu0
  %v912 = vadd.f32 %v863, %v911
  %v913 = vpop.f32.mrf.mxu0
  %v914 = vadd.f32 %v865, %v913
  %915 = vmatmul.bf16.gmra.mxu0 %v777
  %v916 = vpop.f32.mrf.mxu0
  %v917 = vadd.f32 %v868, %v916
  %v918 = vpop.f32.mrf.mxu0
  %v919 = vadd.f32 %v870, %v918
  %920 = vmatmul.bf16.gmra.mxu0 %v780
  %v921 = vpop.f32.mrf.mxu0
  %v922 = vadd.f32 %v873, %v921
  %v923 = vpop.f32.mrf.mxu0
  %v924 = vadd.f32 %v875, %v923
  %925 = vmatmul.bf16.gmra.mxu0 %v783
  %v926 = vpop.f32.mrf.mxu0
  %v927 = vadd.f32 %v878, %v926
  %v928 = vpop.f32.mrf.mxu0
  %v929 = vadd.f32 %v880, %v928
  %930 = vmatmul.bf16.gmra.mxu0 %v786
  %v931 = vpop.f32.mrf.mxu0
  %v932 = vadd.f32 %v883, %v931
  %v933 = vpop.f32.mrf.mxu0
  %v934 = vadd.f32 %v885, %v933
  %935 = vmatmul.bf16.gmra.mxu0 %v789
  %v936 = vpop.f32.mrf.mxu0
  %v937 = vadd.f32 %v888, %v936
  %v938 = vpop.f32.mrf.mxu0
  %v939 = vadd.f32 %v890, %v938
  %940 = vmatmul.bf16.gmra.mxu0 %v792
  %v941 = vpop.f32.mrf.mxu0
  %v942 = vadd.f32 %v893, %v941
  %v943 = vpop.f32.mrf.mxu0
  %v944 = vadd.f32 %v895, %v943
  %945 = vmatmul.bf16.gmra.mxu0 %v795
  %v946 = vpop.f32.mrf.mxu0
  %v947 = vadd.f32 %v898, %v946
  %v948 = vpop.f32.mrf.mxu0
  %v949 = vadd.f32 %v900, %v948
  %950 = vdwg.mxu0
  %951 = vmatpush.bf16.msra.mxu0 %v713
  %952 = vmatpush.bf16.msra.mxu0 %v711
  %953 = vmatpush.bf16.msra.mxu0 %v709
  %954 = vmatpush.bf16.msra.mxu0 %v707
  %955 = vmatpush.bf16.msra.mxu0 %v705
  %956 = vmatpush.bf16.msra.mxu0 %v703
  %957 = vmatpush.bf16.msra.mxu0 %v701
  %958 = vmatpush.bf16.msra.mxu0 %v699
  %959 = vmatmul.bf16.gmra.mxu0 %v516
  %v960 = vpop.f32.mrf.mxu0
  %v961 = vadd.f32 %v581, %v960
  %v962 = vpop.f32.mrf.mxu0
  %v963 = vadd.f32 %v581, %v962
  %964 = vmatmul.bf16.gmra.mxu0 %v519
  %v965 = vpop.f32.mrf.mxu0
  %v966 = vadd.f32 %v581, %v965
  %v967 = vpop.f32.mrf.mxu0
  %v968 = vadd.f32 %v581, %v967
  %969 = vmatmul.bf16.gmra.mxu0 %v522
  %v970 = vpop.f32.mrf.mxu0
  %v971 = vadd.f32 %v581, %v970
  %v972 = vpop.f32.mrf.mxu0
  %v973 = vadd.f32 %v581, %v972
  %974 = vmatmul.bf16.gmra.mxu0 %v525
  %v975 = vpop.f32.mrf.mxu0
  %v976 = vadd.f32 %v581, %v975
  %v977 = vpop.f32.mrf.mxu0
  %v978 = vadd.f32 %v581, %v977
  %979 = vmatmul.bf16.gmra.mxu0 %v528
  %v980 = vpop.f32.mrf.mxu0
  %v981 = vadd.f32 %v581, %v980
  %v982 = vpop.f32.mrf.mxu0
  %v983 = vadd.f32 %v581, %v982
  %984 = vmatmul.bf16.gmra.mxu0 %v531
  %v985 = vpop.f32.mrf.mxu0
  %v986 = vadd.f32 %v581, %v985
  %v987 = vpop.f32.mrf.mxu0
  %v988 = vadd.f32 %v581, %v987
  %989 = vmatmul.bf16.gmra.mxu0 %v534
  %v990 = vpop.f32.mrf.mxu0
  %v991 = vadd.f32 %v581, %v990
  %v992 = vpop.f32.mrf.mxu0
  %v993 = vadd.f32 %v581, %v992
  %994 = vmatmul.bf16.gmra.mxu0 %v537
  %v995 = vpop.f32.mrf.mxu0
  %v996 = vadd.f32 %v581, %v995
  %v997 = vpop.f32.mrf.mxu0
  %v998 = vadd.f32 %v581, %v997
  %999 = vdwg.mxu0
  %1000 = vmatpush.bf16.msra.mxu0 %v729
  %1001 = vmatpush.bf16.msra.mxu0 %v727
  %1002 = vmatpush.bf16.msra.mxu0 %v725
  %1003 = vmatpush.bf16.msra.mxu0 %v723
  %1004 = vmatpush.bf16.msra.mxu0 %v721
  %1005 = vmatpush.bf16.msra.mxu0 %v719
  %1006 = vmatpush.bf16.msra.mxu0 %v717
  %1007 = vmatpush.bf16.msra.mxu0 %v715
  %1008 = vmatmul.bf16.gmra.mxu0 %v517
  %v1009 = vpop.f32.mrf.mxu0
  %v1010 = vadd.f32 %v961, %v1009
  %v1011 = vpop.f32.mrf.mxu0
  %v1012 = vadd.f32 %v963, %v1011
  %1013 = vmatmul.bf16.gmra.mxu0 %v520
  %v1014 = vpop.f32.mrf.mxu0
  %v1015 = vadd.f32 %v966, %v1014
  %v1016 = vpop.f32.mrf.mxu0
  %v1017 = vadd.f32 %v968, %v1016
  %1018 = vmatmul.bf16.gmra.mxu0 %v523
  %v1019 = vpop.f32.mrf.mxu0
  %v1020 = vadd.f32 %v971, %v1019
  %v1021 = vpop.f32.mrf.mxu0
  %v1022 = vadd.f32 %v973, %v1021
  %1023 = vmatmul.bf16.gmra.mxu0 %v526
  %v1024 = vpop.f32.mrf.mxu0
  %v1025 = vadd.f32 %v976, %v1024
  %v1026 = vpop.f32.mrf.mxu0
  %v1027 = vadd.f32 %v978, %v1026
  %1028 = vmatmul.bf16.gmra.mxu0 %v529
  %v1029 = vpop.f32.mrf.mxu0
  %v1030 = vadd.f32 %v981, %v1029
  %v1031 = vpop.f32.mrf.mxu0
  %v1032 = vadd.f32 %v983, %v1031
  %1033 = vmatmul.bf16.gmra.mxu0 %v532
  %v1034 = vpop.f32.mrf.mxu0
  %v1035 = vadd.f32 %v986, %v1034
  %v1036 = vpop.f32.mrf.mxu0
  %v1037 = vadd.f32 %v988, %v1036
  %1038 = vmatmul.bf16.gmra.mxu0 %v535
  %v1039 = vpop.f32.mrf.mxu0
  %v1040 = vadd.f32 %v991, %v1039
  %v1041 = vpop.f32.mrf.mxu0
  %v1042 = vadd.f32 %v993, %v1041
  %1043 = vmatmul.bf16.gmra.mxu0 %v538
  %v1044 = vpop.f32.mrf.mxu0
  %v1045 = vadd.f32 %v996, %v1044
  %v1046 = vpop.f32.mrf.mxu0
  %v1047 = vadd.f32 %v998, %v1046
  %1048 = vdwg.mxu0
  %1049 = vmatpush.bf16.msra.mxu0 0
  %1050 = vmatpush.bf16.msra.mxu0 0
  %1051 = vmatpush.bf16.msra.mxu0 0
  %1052 = vmatpush.bf16.msra.mxu0 0
  %1053 = vmatpush.bf16.msra.mxu0 0
  %1054 = vmatpush.bf16.msra.mxu0 %v802
  %1055 = vmatpush.bf16.msra.mxu0 %v733
  %1056 = vmatpush.bf16.msra.mxu0 %v731
  %1057 = vmatmul.bf16.gmra.mxu0 %v774
  %v1058 = vpop.f32.mrf.mxu0
  %v1059 = vadd.f32 %v1010, %v1058
  %v1060 = vpop.f32.mrf.mxu0
  %v1061 = vadd.f32 %v1012, %v1060
  %1062 = vmatmul.bf16.gmra.mxu0 %v777
  %v1063 = vpop.f32.mrf.mxu0
  %v1064 = vadd.f32 %v1015, %v1063
  %v1065 = vpop.f32.mrf.mxu0
  %v1066 = vadd.f32 %v1017, %v1065
  %1067 = vmatmul.bf16.gmra.mxu0 %v780
  %v1068 = vpop.f32.mrf.mxu0
  %v1069 = vadd.f32 %v1020, %v1068
  %v1070 = vpop.f32.mrf.mxu0
  %v1071 = vadd.f32 %v1022, %v1070
  %1072 = vmatmul.bf16.gmra.mxu0 %v783
  %v1073 = vpop.f32.mrf.mxu0
  %v1074 = vadd.f32 %v1025, %v1073
  %v1075 = vpop.f32.mrf.mxu0
  %v1076 = vadd.f32 %v1027, %v1075
  %1077 = vmatmul.bf16.gmra.mxu0 %v786
  %v1078 = vpop.f32.mrf.mxu0
  %v1079 = vadd.f32 %v1030, %v1078
  %v1080 = vpop.f32.mrf.mxu0
  %v1081 = vadd.f32 %v1032, %v1080
  %1082 = vmatmul.bf16.gmra.mxu0 %v789
  %v1083 = vpop.f32.mrf.mxu0
  %v1084 = vadd.f32 %v1035, %v1083
  %v1085 = vpop.f32.mrf.mxu0
  %v1086 = vadd.f32 %v1037, %v1085
  %1087 = vmatmul.bf16.gmra.mxu0 %v792
  %v1088 = vpop.f32.mrf.mxu0
  %v1089 = vadd.f32 %v1040, %v1088
  %v1090 = vpop.f32.mrf.mxu0
  %v1091 = vadd.f32 %v1042, %v1090
  %1092 = vmatmul.bf16.gmra.mxu0 %v795
  %v1093 = vpop.f32.mrf.mxu0
  %v1094 = vadd.f32 %v1045, %v1093
  %v1095 = vpop.f32.mrf.mxu0
  %v1096 = vadd.f32 %v1047, %v1095
  %1097 = vdwg.mxu0
  %v1098 = vmax.f32 %v912, 0.0
  %v1099 = vmax.f32 %v1059, 0.0
  %v1100 = vmax.f32 %v914, 0.0
  %v1101 = vmax.f32 %v1061, 0.0
  %v1102 = vmax.f32 %v917, 0.0
  %v1103 = vmax.f32 %v1064, 0.0
  %v1104 = vmax.f32 %v919, 0.0
  %v1105 = vmax.f32 %v1066, 0.0
  %v1106 = vmax.f32 %v922, 0.0
  %v1107 = vmax.f32 %v1069, 0.0
  %v1108 = vmax.f32 %v924, 0.0
  %v1109 = vmax.f32 %v1071, 0.0
  %v1110 = vmax.f32 %v927, 0.0
  %v1111 = vmax.f32 %v1074, 0.0
  %v1112 = vmax.f32 %v929, 0.0
  %v1113 = vmax.f32 %v1076, 0.0
  %v1114 = vmax.f32 %v932, 0.0
  %v1115 = vmax.f32 %v1079, 0.0
  %v1116 = vmax.f32 %v934, 0.0
  %v1117 = vmax.f32 %v1081, 0.0
  %v1118 = vmax.f32 %v937, 0.0
  %v1119 = vmax.f32 %v1084, 0.0
  %v1120 = vmax.f32 %v939, 0.0
  %v1121 = vmax.f32 %v1086, 0.0
  %v1122 = vmax.f32 %v942, 0.0
  %v1123 = vmax.f32 %v1089, 0.0
  %v1124 = vmax.f32 %v944, 0.0
  %v1125 = vmax.f32 %v1091, 0.0
  %v1126 = vmax.f32 %v947, 0.0
  %v1127 = vmax.f32 %v1094, 0.0
  %v1128 = vmax.f32 %v949, 0.0
  %v1129 = vmax.f32 %v1096, 0.0
  %v1130 = vpack.c.bf16 %v1100, %v1098
  %v1131 = vpack.c.bf16 %v1101, %v1099
  %v1132 = vpack.c.bf16 %v1104, %v1102
  %v1133 = vpack.c.bf16 %v1105, %v1103
  %v1134 = vpack.c.bf16 %v1108, %v1106
  %v1135 = vpack.c.bf16 %v1109, %v1107
  %v1136 = vpack.c.bf16 %v1112, %v1110
  %v1137 = vpack.c.bf16 %v1113, %v1111
  %v1138 = vpack.c.bf16 %v1116, %v1114
  %v1139 = vpack.c.bf16 %v1117, %v1115
  %v1140 = vpack.c.bf16 %v1120, %v1118
  %v1141 = vpack.c.bf16 %v1121, %v1119
  %v1142 = vpack.c.bf16 %v1124, %v1122
  %v1143 = vpack.c.bf16 %v1125, %v1123
  %v1144 = vpack.c.bf16 %v1128, %v1126
  %v1145 = vpack.c.bf16 %v1129, %v1127
  %v1146 = vld [vmem:[%s7] sm:$0xff]
  %v1147 = vld [vmem:[%s7 + $0x8] sm:$0xff]
  %v1148 = vld [vmem:[%s7 + $0x10] sm:$0xff]
  %v1149 = vld [vmem:[%s7 + $0x18] sm:$0xff]
  %v1150 = vld [vmem:[%s7 + $0x20] sm:$0xff]
  %v1151 = vld [vmem:[%s7 + $0x28] sm:$0xff]
  %v1152 = vld [vmem:[%s7 + $0x30] sm:$0xff]
  %v1153 = vld [vmem:[%s7 + $0x38] sm:$0xff]
  %v1154 = vld [vmem:[%s7 + $0x40] sm:$0xff]
  %v1155 = vld [vmem:[%s7 + $0x48] sm:$0xff]
  %v1156 = vld [vmem:[%s7 + $0x50] sm:$0xff]
  %v1157 = vld [vmem:[%s7 + $0x58] sm:$0xff]
  %v1158 = vld [vmem:[%s7 + $0x60] sm:$0xff]
  %v1159 = vld [vmem:[%s7 + $0x68] sm:$0xff]
  %v1160 = vld [vmem:[%s7 + $0x70] sm:$0xff]
  %v1161 = vld [vmem:[%s7 + $0x78] sm:$0xff]
  %v1162 = vld [vmem:[%s7 + $0x80] sm:$0xff]
  %v1163 = vld [vmem:[%s7 + $0x88] sm:$0xff]
  %v1164 = vld [vmem:[%s7 + $0x90] sm:$0xff]
  %v1165 = vld [vmem:[%s7 + $0x98] sm:$0xff]
  %v1166 = vld [vmem:[%s7 + $0xa0] sm:$0xff]
  %v1167 = vld [vmem:[%s7 + $0xa8] sm:$0xff]
  %v1168 = vld [vmem:[%s7 + $0xb0] sm:$0xff]
  %v1169 = vld [vmem:[%s7 + $0xb8] sm:$0xff]
  %v1170 = vld [vmem:[%s7 + $0xc0] sm:$0xff]
  %v1171 = vld [vmem:[%s8] sm:$0x3]
  %v1173 = vperm.slane %v1171, 0
  %v1174 = vperm.slane %v1171, 1
  %v1202 = vunpack.c.l.b16 %v1146
  %v1203 = vunpack.c.h.b16 %v1146
  %v1204 = vunpack.c.l.b16 %v1147
  %v1205 = vunpack.c.h.b16 %v1147
  %v1206 = vunpack.c.l.b16 %v1148
  %v1207 = vunpack.c.h.b16 %v1148
  %v1208 = vunpack.c.l.b16 %v1149
  %v1209 = vunpack.c.h.b16 %v1149
  %v1210 = vunpack.c.l.b16 %v1150
  %v1211 = vunpack.c.h.b16 %v1150
  %v1212 = vunpack.c.l.b16 %v1151
  %v1213 = vunpack.c.h.b16 %v1151
  %v1214 = vunpack.c.l.b16 %v1152
  %v1215 = vunpack.c.h.b16 %v1152
  %v1216 = vunpack.c.l.b16 %v1153
  %v1217 = vunpack.c.h.b16 %v1153
  %v1218 = vunpack.c.l.b16 %v1154
  %v1219 = vunpack.c.h.b16 %v1154
  %v1220 = vunpack.c.l.b16 %v1155
  %v1221 = vunpack.c.h.b16 %v1155
  %v1222 = vunpack.c.l.b16 %v1156
  %v1223 = vunpack.c.h.b16 %v1156
  %v1224 = vunpack.c.l.b16 %v1157
  %v1225 = vunpack.c.h.b16 %v1157
  %v1226 = vunpack.c.l.b16 %v1158
  %v1227 = vunpack.c.h.b16 %v1158
  %v1228 = vunpack.c.l.b16 %v1159
  %v1229 = vunpack.c.h.b16 %v1159
  %v1230 = vunpack.c.l.b16 %v1160
  %v1231 = vunpack.c.h.b16 %v1160
  %v1232 = vunpack.c.l.b16 %v1161
  %v1233 = vunpack.c.h.b16 %v1161
  %v1234 = vunpack.c.l.b16 %v1162
  %v1235 = vunpack.c.h.b16 %v1162
  %v1236 = vunpack.c.l.b16 %v1163
  %v1237 = vunpack.c.h.b16 %v1163
  %v1238 = vunpack.c.l.b16 %v1164
  %v1239 = vunpack.c.h.b16 %v1164
  %v1240 = vunpack.c.l.b16 %v1165
  %v1241 = vunpack.c.h.b16 %v1165
  %v1242 = vunpack.c.l.b16 %v1166
  %v1243 = vunpack.c.h.b16 %v1166
  %v1244 = vunpack.c.l.b16 %v1167
  %v1245 = vunpack.c.h.b16 %v1167
  %v1246 = vunpack.c.l.b16 %v1168
  %v1247 = vunpack.c.h.b16 %v1168
  %v1248 = vunpack.c.l.b16 %v1169
  %v1249 = vunpack.c.h.b16 %v1169
  %v1250 = vunpack.c.l.b16 %v1170
  %v1251 = vunpack.c.h.b16 %v1170
  %v1252 = vpack.c.b16 %v1204, %v1202
  %v1253 = vpack.c.b16 %v1205, %v1203
  %v1254 = vpack.c.b16 %v1208, %v1206
  %v1255 = vpack.c.b16 %v1209, %v1207
  %v1256 = vpack.c.b16 %v1212, %v1210
  %v1257 = vpack.c.b16 %v1213, %v1211
  %v1258 = vpack.c.b16 %v1216, %v1214
  %v1259 = vpack.c.b16 %v1217, %v1215
  %v1260 = vpack.c.b16 %v1220, %v1218
  %v1261 = vpack.c.b16 %v1221, %v1219
  %v1262 = vpack.c.b16 %v1224, %v1222
  %v1263 = vpack.c.b16 %v1225, %v1223
  %v1264 = vpack.c.b16 %v1228, %v1226
  %v1265 = vpack.c.b16 %v1229, %v1227
  %v1266 = vpack.c.b16 %v1232, %v1230
  %v1267 = vpack.c.b16 %v1233, %v1231
  %v1268 = vpack.c.b16 %v1236, %v1234
  %v1269 = vpack.c.b16 %v1237, %v1235
  %v1270 = vpack.c.b16 %v1240, %v1238
  %v1271 = vpack.c.b16 %v1241, %v1239
  %v1272 = vpack.c.b16 %v1244, %v1242
  %v1273 = vpack.c.b16 %v1245, %v1243
  %v1274 = vpack.c.b16 %v1248, %v1246
  %v1275 = vpack.c.b16 %v1249, %v1247
  %v1276 = vpack.c.b16 %v1250, %v1250
  %v1277 = vpack.c.b16 %v1251, %v1251
  %vm1302 = vcmask 588800
  %v1304 = vsel %vm1302, %v1131, 0
  %v1307 = vsel %vm1302, %v1133, 0
  %v1310 = vsel %vm1302, %v1135, 0
  %v1313 = vsel %vm1302, %v1137, 0
  %v1316 = vsel %vm1302, %v1139, 0
  %v1319 = vsel %vm1302, %v1141, 0
  %v1322 = vsel %vm1302, %v1143, 0
  %v1325 = vsel %vm1302, %v1145, 0
  %v1328 = vsel %vm253, %v1276, 0
  %v1331 = vsel %vm253, %v1277, 0
  %1333 = vmatpush.bf16.msra.mxu0 %v1266
  %1334 = vmatpush.bf16.msra.mxu0 %v1264
  %1335 = vmatpush.bf16.msra.mxu0 %v1262
  %1336 = vmatpush.bf16.msra.mxu0 %v1260
  %1337 = vmatpush.bf16.msra.mxu0 %v1258
  %1338 = vmatpush.bf16.msra.mxu0 %v1256
  %1339 = vmatpush.bf16.msra.mxu0 %v1254
  %1340 = vmatpush.bf16.msra.mxu0 %v1252
  %1341 = vmatmul.bf16.gmra.mxu0 %v1130
  %v1342 = vpop.f32.mrf.mxu0
  %v1343 = vadd.f32 %v1173, %v1342
  %v1344 = vpop.f32.mrf.mxu0
  %v1345 = vadd.f32 %v1173, %v1344
  %1346 = vmatmul.bf16.gmra.mxu0 %v1132
  %v1347 = vpop.f32.mrf.mxu0
  %v1348 = vadd.f32 %v1173, %v1347
  %v1349 = vpop.f32.mrf.mxu0
  %v1350 = vadd.f32 %v1173, %v1349
  %1351 = vmatmul.bf16.gmra.mxu0 %v1134
  %v1352 = vpop.f32.mrf.mxu0
  %v1353 = vadd.f32 %v1173, %v1352
  %v1354 = vpop.f32.mrf.mxu0
  %v1355 = vadd.f32 %v1173, %v1354
  %1356 = vmatmul.bf16.gmra.mxu0 %v1136
  %v1357 = vpop.f32.mrf.mxu0
  %v1358 = vadd.f32 %v1173, %v1357
  %v1359 = vpop.f32.mrf.mxu0
  %v1360 = vadd.f32 %v1173, %v1359
  %1361 = vmatmul.bf16.gmra.mxu0 %v1138
  %v1362 = vpop.f32.mrf.mxu0
  %v1363 = vadd.f32 %v1173, %v1362
  %v1364 = vpop.f32.mrf.mxu0
  %v1365 = vadd.f32 %v1173, %v1364
  %1366 = vmatmul.bf16.gmra.mxu0 %v1140
  %v1367 = vpop.f32.mrf.mxu0
  %v1368 = vadd.f32 %v1173, %v1367
  %v1369 = vpop.f32.mrf.mxu0
  %v1370 = vadd.f32 %v1173, %v1369
  %1371 = vmatmul.bf16.gmra.mxu0 %v1142
  %v1372 = vpop.f32.mrf.mxu0
  %v1373 = vadd.f32 %v1173, %v1372
  %v1374 = vpop.f32.mrf.mxu0
  %v1375 = vadd.f32 %v1173, %v1374
  %1376 = vmatmul.bf16.gmra.mxu0 %v1144
  %v1377 = vpop.f32.mrf.mxu0
  %v1378 = vadd.f32 %v1173, %v1377
  %v1379 = vpop.f32.mrf.mxu0
  %v1380 = vadd.f32 %v1173, %v1379
  %1381 = vdwg.mxu0
  %1382 = vmatpush.bf16.msra.mxu0 0
  %1383 = vmatpush.bf16.msra.mxu0 0
  %1384 = vmatpush.bf16.msra.mxu0 0
  %1385 = vmatpush.bf16.msra.mxu0 %v1328
  %1386 = vmatpush.bf16.msra.mxu0 %v1274
  %1387 = vmatpush.bf16.msra.mxu0 %v1272
  %1388 = vmatpush.bf16.msra.mxu0 %v1270
  %1389 = vmatpush.bf16.msra.mxu0 %v1268
  %1390 = vmatmul.bf16.gmra.mxu0 %v1304
  %v1391 = vpop.f32.mrf.mxu0
  %v1392 = vadd.f32 %v1343, %v1391
  %v1393 = vpop.f32.mrf.mxu0
  %v1394 = vadd.f32 %v1345, %v1393
  %1395 = vmatmul.bf16.gmra.mxu0 %v1307
  %v1396 = vpop.f32.mrf.mxu0
  %v1397 = vadd.f32 %v1348, %v1396
  %v1398 = vpop.f32.mrf.mxu0
  %v1399 = vadd.f32 %v1350, %v1398
  %1400 = vmatmul.bf16.gmra.mxu0 %v1310
  %v1401 = vpop.f32.mrf.mxu0
  %v1402 = vadd.f32 %v1353, %v1401
  %v1403 = vpop.f32.mrf.mxu0
  %v1404 = vadd.f32 %v1355, %v1403
  %1405 = vmatmul.bf16.gmra.mxu0 %v1313
  %v1406 = vpop.f32.mrf.mxu0
  %v1407 = vadd.f32 %v1358, %v1406
  %v1408 = vpop.f32.mrf.mxu0
  %v1409 = vadd.f32 %v1360, %v1408
  %1410 = vmatmul.bf16.gmra.mxu0 %v1316
  %v1411 = vpop.f32.mrf.mxu0
  %v1412 = vadd.f32 %v1363, %v1411
  %v1413 = vpop.f32.mrf.mxu0
  %v1414 = vadd.f32 %v1365, %v1413
  %1415 = vmatmul.bf16.gmra.mxu0 %v1319
  %v1416 = vpop.f32.mrf.mxu0
  %v1417 = vadd.f32 %v1368, %v1416
  %v1418 = vpop.f32.mrf.mxu0
  %v1419 = vadd.f32 %v1370, %v1418
  %1420 = vmatmul.bf16.gmra.mxu0 %v1322
  %v1421 = vpop.f32.mrf.mxu0
  %v1422 = vadd.f32 %v1373, %v1421
  %v1423 = vpop.f32.mrf.mxu0
  %v1424 = vadd.f32 %v1375, %v1423
  %1425 = vmatmul.bf16.gmra.mxu0 %v1325
  %v1426 = vpop.f32.mrf.mxu0
  %v1427 = vadd.f32 %v1378, %v1426
  %v1428 = vpop.f32.mrf.mxu0
  %v1429 = vadd.f32 %v1380, %v1428
  %1430 = vdwg.mxu0
  %1431 = vmatpush.bf16.msra.mxu0 %v1267
  %1432 = vmatpush.bf16.msra.mxu0 %v1265
  %1433 = vmatpush.bf16.msra.mxu0 %v1263
  %1434 = vmatpush.bf16.msra.mxu0 %v1261
  %1435 = vmatpush.bf16.msra.mxu0 %v1259
  %1436 = vmatpush.bf16.msra.mxu0 %v1257
  %1437 = vmatpush.bf16.msra.mxu0 %v1255
  %1438 = vmatpush.bf16.msra.mxu0 %v1253
  %1439 = vmatmul.bf16.gmra.mxu0 %v1130
  %v1440 = vpop.f32.mrf.mxu0
  %v1441 = vadd.f32 %v1174, %v1440
  %v1442 = vpop.f32.mrf.mxu0
  %v1443 = vadd.f32 %v1174, %v1442
  %1444 = vmatmul.bf16.gmra.mxu0 %v1132
  %v1445 = vpop.f32.mrf.mxu0
  %v1446 = vadd.f32 %v1174, %v1445
  %v1447 = vpop.f32.mrf.mxu0
  %v1448 = vadd.f32 %v1174, %v1447
  %1449 = vmatmul.bf16.gmra.mxu0 %v1134
  %v1450 = vpop.f32.mrf.mxu0
  %v1451 = vadd.f32 %v1174, %v1450
  %v1452 = vpop.f32.mrf.mxu0
  %v1453 = vadd.f32 %v1174, %v1452
  %1454 = vmatmul.bf16.gmra.mxu0 %v1136
  %v1455 = vpop.f32.mrf.mxu0
  %v1456 = vadd.f32 %v1174, %v1455
  %v1457 = vpop.f32.mrf.mxu0
  %v1458 = vadd.f32 %v1174, %v1457
  %1459 = vmatmul.bf16.gmra.mxu0 %v1138
  %v1460 = vpop.f32.mrf.mxu0
  %v1461 = vadd.f32 %v1174, %v1460
  %v1462 = vpop.f32.mrf.mxu0
  %v1463 = vadd.f32 %v1174, %v1462
  %1464 = vmatmul.bf16.gmra.mxu0 %v1140
  %v1465 = vpop.f32.mrf.mxu0
  %v1466 = vadd.f32 %v1174, %v1465
  %v1467 = vpop.f32.mrf.mxu0
  %v1468 = vadd.f32 %v1174, %v1467
  %1469 = vmatmul.bf16.gmra.mxu0 %v1142
  %v1470 = vpop.f32.mrf.mxu0
  %v1471 = vadd.f32 %v1174, %v1470
  %v1472 = vpop.f32.mrf.mxu0
  %v1473 = vadd.f32 %v1174, %v1472
  %1474 = vmatmul.bf16.gmra.mxu0 %v1144
  %v1475 = vpop.f32.mrf.mxu0
  %v1476 = vadd.f32 %v1174, %v1475
  %v1477 = vpop.f32.mrf.mxu0
  %v1478 = vadd.f32 %v1174, %v1477
  %1479 = vdwg.mxu0
  %1480 = vmatpush.bf16.msra.mxu0 0
  %1481 = vmatpush.bf16.msra.mxu0 0
  %1482 = vmatpush.bf16.msra.mxu0 0
  %1483 = vmatpush.bf16.msra.mxu0 %v1331
  %1484 = vmatpush.bf16.msra.mxu0 %v1275
  %1485 = vmatpush.bf16.msra.mxu0 %v1273
  %1486 = vmatpush.bf16.msra.mxu0 %v1271
  %1487 = vmatpush.bf16.msra.mxu0 %v1269
  %1488 = vmatmul.bf16.gmra.mxu0 %v1304
  %v1489 = vpop.f32.mrf.mxu0
  %v1490 = vadd.f32 %v1441, %v1489
  %v1491 = vpop.f32.mrf.mxu0
  %v1492 = vadd.f32 %v1443, %v1491
  %1493 = vmatmul.bf16.gmra.mxu0 %v1307
  %v1494 = vpop.f32.mrf.mxu0
  %v1495 = vadd.f32 %v1446, %v1494
  %v1496 = vpop.f32.mrf.mxu0
  %v1497 = vadd.f32 %v1448, %v1496
  %1498 = vmatmul.bf16.gmra.mxu0 %v1310
  %v1499 = vpop.f32.mrf.mxu0
  %v1500 = vadd.f32 %v1451, %v1499
  %v1501 = vpop.f32.mrf.mxu0
  %v1502 = vadd.f32 %v1453, %v1501
  %1503 = vmatmul.bf16.gmra.mxu0 %v1313
  %v1504 = vpop.f32.mrf.mxu0
  %v1505 = vadd.f32 %v1456, %v1504
  %v1506 = vpop.f32.mrf.mxu0
  %v1507 = vadd.f32 %v1458, %v1506
  %1508 = vmatmul.bf16.gmra.mxu0 %v1316
  %v1509 = vpop.f32.mrf.mxu0
  %v1510 = vadd.f32 %v1461, %v1509
  %v1511 = vpop.f32.mrf.mxu0
  %v1512 = vadd.f32 %v1463, %v1511
  %1513 = vmatmul.bf16.gmra.mxu0 %v1319
  %v1514 = vpop.f32.mrf.mxu0
  %v1515 = vadd.f32 %v1466, %v1514
  %v1516 = vpop.f32.mrf.mxu0
  %v1517 = vadd.f32 %v1468, %v1516
  %1518 = vmatmul.bf16.gmra.mxu0 %v1322
  %v1519 = vpop.f32.mrf.mxu0
  %v1520 = vadd.f32 %v1471, %v1519
  %v1521 = vpop.f32.mrf.mxu0
  %v1522 = vadd.f32 %v1473, %v1521
  %1523 = vmatmul.bf16.gmra.mxu0 %v1325
  %v1524 = vpop.f32.mrf.mxu0
  %v1525 = vadd.f32 %v1476, %v1524
  %v1526 = vpop.f32.mrf.mxu0
  %v1527 = vadd.f32 %v1478, %v1526
  %1528 = vdwg.mxu0
  %v1529 = vmax.f32 %v1392, 0.0
  %v1530 = vmax.f32 %v1490, 0.0
  %v1531 = vmax.f32 %v1394, 0.0
  %v1532 = vmax.f32 %v1492, 0.0
  %v1533 = vmax.f32 %v1397, 0.0
  %v1534 = vmax.f32 %v1495, 0.0
  %v1535 = vmax.f32 %v1399, 0.0
  %v1536 = vmax.f32 %v1497, 0.0
  %v1537 = vmax.f32 %v1402, 0.0
  %v1538 = vmax.f32 %v1500, 0.0
  %v1539 = vmax.f32 %v1404, 0.0
  %v1540 = vmax.f32 %v1502, 0.0
  %v1541 = vmax.f32 %v1407, 0.0
  %v1542 = vmax.f32 %v1505, 0.0
  %v1543 = vmax.f32 %v1409, 0.0
  %v1544 = vmax.f32 %v1507, 0.0
  %v1545 = vmax.f32 %v1412, 0.0
  %v1546 = vmax.f32 %v1510, 0.0
  %v1547 = vmax.f32 %v1414, 0.0
  %v1548 = vmax.f32 %v1512, 0.0
  %v1549 = vmax.f32 %v1417, 0.0
  %v1550 = vmax.f32 %v1515, 0.0
  %v1551 = vmax.f32 %v1419, 0.0
  %v1552 = vmax.f32 %v1517, 0.0
  %v1553 = vmax.f32 %v1422, 0.0
  %v1554 = vmax.f32 %v1520, 0.0
  %v1555 = vmax.f32 %v1424, 0.0
  %v1556 = vmax.f32 %v1522, 0.0
  %v1557 = vmax.f32 %v1427, 0.0
  %v1558 = vmax.f32 %v1525, 0.0
  %v1559 = vmax.f32 %v1429, 0.0
  %v1560 = vmax.f32 %v1527, 0.0
  %v1561 = vld [vmem:[%s9] sm:$0x3]
  %v1563 = vperm.slane %v1561, 0
  %v1564 = vperm.slane %v1561, 1
  %v1567 = vmul.f32 %v1529, %v1563
  %v1568 = vmul.f32 %v1530, %v1564
  %v1569 = vmul.f32 %v1531, %v1563
  %v1570 = vmul.f32 %v1532, %v1564
  %v1571 = vmul.f32 %v1533, %v1563
  %v1572 = vmul.f32 %v1534, %v1564
  %v1573 = vmul.f32 %v1535, %v1563
  %v1574 = vmul.f32 %v1536, %v1564
  %v1575 = vmul.f32 %v1537, %v1563
  %v1576 = vmul.f32 %v1538, %v1564
  %v1577 = vmul.f32 %v1539, %v1563
  %v1578 = vmul.f32 %v1540, %v1564
  %v1579 = vmul.f32 %v1541, %v1563
  %v1580 = vmul.f32 %v1542, %v1564
  %v1581 = vmul.f32 %v1543, %v1563
  %v1582 = vmul.f32 %v1544, %v1564
  %v1583 = vmul.f32 %v1545, %v1563
  %v1584 = vmul.f32 %v1546, %v1564
  %v1585 = vmul.f32 %v1547, %v1563
  %v1586 = vmul.f32 %v1548, %v1564
  %v1587 = vmul.f32 %v1549, %v1563
  %v1588 = vmul.f32 %v1550, %v1564
  %v1589 = vmul.f32 %v1551, %v1563
  %v1590 = vmul.f32 %v1552, %v1564
  %v1591 = vmul.f32 %v1553, %v1563
  %v1592 = vmul.f32 %v1554, %v1564
  %v1593 = vmul.f32 %v1555, %v1563
  %v1594 = vmul.f32 %v1556, %v1564
  %v1595 = vmul.f32 %v1557, %v1563
  %v1596 = vmul.f32 %v1558, %v1564
  %v1597 = vmul.f32 %v1559, %v1563
  %v1598 = vmul.f32 %v1560, %v1564
  %v1599 = vsel %vm1302, %v1568, 0.0
  %v1600 = vadd.f32 %v1567, %v1599
  %1601 = vadd.xlane.f32.xlu0 %v1600
  %v1602 = vpop.xlane.xlu0 %1601
  %v1603 = vsel %vm1302, %v1570, 0.0
  %v1604 = vadd.f32 %v1569, %v1603
  %1605 = vadd.xlane.f32.xlu0 %v1604
  %v1606 = vpop.xlane.xlu0 %1605
  %v1607 = vsel %vm1302, %v1572, 0.0
  %v1608 = vadd.f32 %v1571, %v1607
  %1609 = vadd.xlane.f32.xlu0 %v1608
  %v1610 = vpop.xlane.xlu0 %1609
  %v1611 = vsel %vm1302, %v1574, 0.0
  %v1612 = vadd.f32 %v1573, %v1611
  %1613 = vadd.xlane.f32.xlu0 %v1612
  %v1614 = vpop.xlane.xlu0 %1613
  %v1615 = vsel %vm1302, %v1576, 0.0
  %v1616 = vadd.f32 %v1575, %v1615
  %1617 = vadd.xlane.f32.xlu0 %v1616
  %v1618 = vpop.xlane.xlu0 %1617
  %v1619 = vsel %vm1302, %v1578, 0.0
  %v1620 = vadd.f32 %v1577, %v1619
  %1621 = vadd.xlane.f32.xlu0 %v1620
  %v1622 = vpop.xlane.xlu0 %1621
  %v1623 = vsel %vm1302, %v1580, 0.0
  %v1624 = vadd.f32 %v1579, %v1623
  %1625 = vadd.xlane.f32.xlu0 %v1624
  %v1626 = vpop.xlane.xlu0 %1625
  %v1627 = vsel %vm1302, %v1582, 0.0
  %v1628 = vadd.f32 %v1581, %v1627
  %1629 = vadd.xlane.f32.xlu0 %v1628
  %v1630 = vpop.xlane.xlu0 %1629
  %v1631 = vsel %vm1302, %v1584, 0.0
  %v1632 = vadd.f32 %v1583, %v1631
  %1633 = vadd.xlane.f32.xlu0 %v1632
  %v1634 = vpop.xlane.xlu0 %1633
  %v1635 = vsel %vm1302, %v1586, 0.0
  %v1636 = vadd.f32 %v1585, %v1635
  %1637 = vadd.xlane.f32.xlu0 %v1636
  %v1638 = vpop.xlane.xlu0 %1637
  %v1639 = vsel %vm1302, %v1588, 0.0
  %v1640 = vadd.f32 %v1587, %v1639
  %1641 = vadd.xlane.f32.xlu0 %v1640
  %v1642 = vpop.xlane.xlu0 %1641
  %v1643 = vsel %vm1302, %v1590, 0.0
  %v1644 = vadd.f32 %v1589, %v1643
  %1645 = vadd.xlane.f32.xlu0 %v1644
  %v1646 = vpop.xlane.xlu0 %1645
  %v1647 = vsel %vm1302, %v1592, 0.0
  %v1648 = vadd.f32 %v1591, %v1647
  %1649 = vadd.xlane.f32.xlu0 %v1648
  %v1650 = vpop.xlane.xlu0 %1649
  %v1651 = vsel %vm1302, %v1594, 0.0
  %v1652 = vadd.f32 %v1593, %v1651
  %1653 = vadd.xlane.f32.xlu0 %v1652
  %v1654 = vpop.xlane.xlu0 %1653
  %v1655 = vsel %vm1302, %v1596, 0.0
  %v1656 = vadd.f32 %v1595, %v1655
  %1657 = vadd.xlane.f32.xlu0 %v1656
  %v1658 = vpop.xlane.xlu0 %1657
  %v1659 = vsel %vm1302, %v1598, 0.0
  %v1660 = vadd.f32 %v1597, %v1659
  %1661 = vadd.xlane.f32.xlu0 %v1660
  %v1662 = vpop.xlane.xlu0 %1661
  %v1663 = vld [vmem:[#allocation2] sm:$0x1]
  %v1665 = vperm.slane %v1663, 0
  %v1667 = vadd.f32 %v1602, %v1665
  %v1668 = vadd.f32 %v1606, %v1665
  %v1669 = vadd.f32 %v1610, %v1665
  %v1670 = vadd.f32 %v1614, %v1665
  %v1671 = vadd.f32 %v1618, %v1665
  %v1672 = vadd.f32 %v1622, %v1665
  %v1673 = vadd.f32 %v1626, %v1665
  %v1674 = vadd.f32 %v1630, %v1665
  %v1675 = vadd.f32 %v1634, %v1665
  %v1676 = vadd.f32 %v1638, %v1665
  %v1677 = vadd.f32 %v1642, %v1665
  %v1678 = vadd.f32 %v1646, %v1665
  %v1679 = vadd.f32 %v1650, %v1665
  %v1680 = vadd.f32 %v1654, %v1665
  %v1681 = vadd.f32 %v1658, %v1665
  %v1682 = vadd.f32 %v1662, %v1665
  %vm1683 = vcmask 7168
  %1684 = vst.msk [vmem:[%s11] sm:$0xff] %vm1683, %v1667
  %1685 = vst.msk [vmem:[%s11 + $0x8] sm:$0xff] %vm1683, %v1668
  %1686 = vst.msk [vmem:[%s11 + $0x10] sm:$0xff] %vm1683, %v1669
  %1687 = vst.msk [vmem:[%s11 + $0x18] sm:$0xff] %vm1683, %v1670
  %1688 = vst.msk [vmem:[%s11 + $0x20] sm:$0xff] %vm1683, %v1671
  %1689 = vst.msk [vmem:[%s11 + $0x28] sm:$0xff] %vm1683, %v1672
  %1690 = vst.msk [vmem:[%s11 + $0x30] sm:$0xff] %vm1683, %v1673
  %1691 = vst.msk [vmem:[%s11 + $0x38] sm:$0xff] %vm1683, %v1674
  %1692 = vst.msk [vmem:[%s11 + $0x40] sm:$0xff] %vm1683, %v1675
  %1693 = vst.msk [vmem:[%s11 + $0x48] sm:$0xff] %vm1683, %v1676
  %1694 = vst.msk [vmem:[%s11 + $0x50] sm:$0xff] %vm1683, %v1677
  %1695 = vst.msk [vmem:[%s11 + $0x58] sm:$0xff] %vm1683, %v1678
  %1696 = vst.msk [vmem:[%s11 + $0x60] sm:$0xff] %vm1683, %v1679
  %1697 = vst.msk [vmem:[%s11 + $0x68] sm:$0xff] %vm1683, %v1680
  %1698 = vst.msk [vmem:[%s11 + $0x70] sm:$0xff] %vm1683, %v1681
  %1699 = vst.msk [vmem:[%s11 + $0x78] sm:$0xff] %vm1683, %v1682
  // Predicated region
  $region46: #{critic_forward.1} parent=0 // pred_check
    _
  $region47: #{critic_forward.1} parent=0 // pred_check_branch
    %1701 = sbr.rel (0) target = $region49
  $region48: #{critic_forward.1} parent=0 // pred_region
    _
  $region49: #{critic_forward.1} parent=0 // pred_fallthru
    _
  // Predicated region
  $region50: #{critic_forward.1} parent=0 // pred_check
    _
  $region51: #{critic_forward.1} parent=0 // pred_check_branch
    %1703 = sbr.rel (0) target = $region53
  $region52: #{critic_forward.1} parent=0 // pred_region
    _
  $region53: #{critic_forward.1} parent=0 // pred_fallthru
    _

</llo_original>
